<compile_context>
chip_gen: v5e
topology: v5e:2x2
jax: 0.10.0
libtpu: 0.0.40
codegen_flags: <defaults>
</compile_context>

<pallas_src>
import functools

import jax
import jax.numpy as jnp
from jax.experimental import pallas as pl
from jax.experimental.pallas import tpu as pltpu


# --------------------------------------------------------------------------- #
# Kernels
# --------------------------------------------------------------------------- #
def _mlp_head(pooled, w1_ref, b1_ref, w2_ref, b2_ref):
    """pooled: (n_blk, C) f32 -> (n_blk, 1) f32. Linear -> LeakyReLU -> Linear."""
    h = jnp.dot(pooled, w1_ref[...],
                preferred_element_type=jnp.float32) + b1_ref[...]        # (n_blk, H1)
    h = jnp.where(h > 0, h, 0.01 * h)                                    # LeakyReLU(0.01)
    # Linear(H1, 1) on VPU + XLU (avoid a 1-wide MXU pass); b2 is an SMEM scalar.
    return jnp.sum(h * w2_ref[...], axis=-1, keepdims=True) + b2_ref[0]  # (n_blk, 1)


def rf_head_kernel_single(x_ref, w1_ref, b1_ref, w2_ref, b2_ref, out_ref, *, inv_hw):
    """Full-HW path. grid = (N blocks,). x_ref: (n_blk, C, HW); out_ref: (1, n_blk, 1)."""
    pooled = jnp.sum(x_ref[...], axis=-1) * inv_hw          # AdaptiveAvgPool2d + Flatten
    out = _mlp_head(pooled, w1_ref, b1_ref, w2_ref, b2_ref)
    out_ref[...] = out[None, :, :].astype(out_ref.dtype)    # leading unit dim: no relayout


def rf_head_kernel_tiled(x_ref, w1_ref, b1_ref, w2_ref, b2_ref, out_ref, acc_ref,
                         *, inv_hw, hw_total, hw_blk, mask_tail):
    """HW-tiled path. grid = (N blocks, HW blocks). acc_ref: (n_blk, C) VMEM scratch."""
    k = pl.program_id(1)

    @pl.when(k == 0)
    def _init():
        acc_ref[...] = jnp.zeros_like(acc_ref)

    x = x_ref[...]
    if mask_tail:  # static flag: only emitted when HW % hw_blk != 0 (ragged tail block)
        lane = jax.lax.broadcasted_iota(jnp.int32, x.shape, dimension=2)
        x = jnp.where(k * hw_blk + lane < hw_total, x, 0.0)
    # Partial spatial sum for this HW tile (lane-axis reduce, hides under DMA).
    acc_ref[...] += jnp.sum(x, axis=-1)

    @pl.when(k == pl.num_programs(1) - 1)
    def _finalize():
        out = _mlp_head(acc_ref[...] * inv_hw, w1_ref, b1_ref, w2_ref, b2_ref)
        out_ref[...] = out[None, :, :].astype(out_ref.dtype)


# --------------------------------------------------------------------------- #
# Block planning (generation-aware VMEM budget)
# --------------------------------------------------------------------------- #
def _ceil_to(x, m):
    return -(-x // m) * m


def _padded_block_bytes(n_blk, c, hw_blk, itemsize=4):
    # (n_blk, C, hw_blk) f32 block: C on sublanes (pad to 8), HW on lanes (pad to 128).
    return n_blk * _ceil_to(c, 8) * _ceil_to(hw_blk, 128) * itemsize


def _vmem_capacity_bytes():
    try:
        cap = getattr(pltpu.get_tpu_info(), "vmem_capacity_bytes", None)
        if cap:
            return int(cap)
    except Exception:
        pass
    return 64 << 20  # conservative default: v7x per-TensorCore VMEM


def _plan_blocks(n, c, hw, x_buf_budget):
    """Pick (n_blk, hw_blk) jointly against the per-buffer VMEM byte budget.

    Prefer hw_blk == full HW (contiguous per-sample DMA, no reduction axis) and shrink
    n_blk first; only tile HW when a single sample's (C, HW) slab exceeds the budget.
    """
    per_sample = _padded_block_bytes(1, c, hw)
    if per_sample <= x_buf_budget:
        n_blk = max(1, min(n, x_buf_budget // per_sample))
        if n >= 2:  # keep >= 2 batch blocks so both TensorCores get work (v7x megacore)
            n_blk = min(n_blk, -(-n // 2))
        while n % n_blk != 0:  # avoid a ragged tail block on the batch axis
            n_blk -= 1
        return n_blk, hw
    # Single-sample slab too big: stream HW in lane-aligned tiles with n_blk = 1.
    slab_128 = _padded_block_bytes(1, c, 128)
    hw_blk = max(128, (x_buf_budget // slab_128) * 128)
    hw_blk = min(hw_blk, _ceil_to(hw, 128))
    if hw % 128 == 0:  # prefer a tile that divides HW exactly (no masked tail)
        while hw % hw_blk != 0:
            hw_blk -= 128
    return 1, hw_blk
    # TODO(synk): for N == 1 with a huge HW reduction, a core_parallel split of the HW
    # axis with a cross-core combine would use both v7x TensorCores; not needed here.


# --------------------------------------------------------------------------- #
# Wrapper
# --------------------------------------------------------------------------- #
_BUFFERED_ONE_OK = True  # flipped to False if pl.Buffered(1) is rejected at lowering


def rf_classifier_forward(x_nchw, w1, b1, w2, b2, *, n_block=None, hw_block=None):
    """Forward of RFClassifierNet.

    x_nchw: (N, C, H, W) float32 (same layout as the torch module).
    w1: (C, 256) or torch Linear layout (256, C) -- transposed (not reshaped) if needed.
    b1: (256,);  w2: (256, 1) / (1, 256) / (256,);  b2: scalar or (1,).
    """
    global _BUFFERED_ONE_OK

    n, c, h, w = x_nchw.shape
    hw = h * w
    x = x_nchw.reshape(n, c, hw)  # free reshape -- no transpose, no HBM copy

    # Weight layout: accept (C, hidden); transpose torch's (hidden, C). When C == hidden
    # the (C, hidden) convention is assumed.
    if w1.ndim != 2:
        raise ValueError("w1 must be 2-D")
    w1_mat = w1 if w1.shape[0] == c else w1.T
    hidden = w1_mat.shape[1]
    b1_row = jnp.asarray(b1, jnp.float32).reshape(1, hidden)
    w2_row = jnp.asarray(w2, jnp.float32).reshape(1, hidden)  # safe: one dim is 1
    b2_s = jnp.asarray(b2, jnp.float32).reshape(1)

    # ---- block planning against a per-generation VMEM budget ----
    vmem_cap = _vmem_capacity_bytes()
    x_buf_budget = max(2 << 20, vmem_cap // 8)  # ~8 MiB/buffer on v7x, ~16 MiB on v5e/v6e
    auto_n, auto_hw = _plan_blocks(n, c, hw, x_buf_budget)

    n_blk = int(n_block) if n_block else auto_n
    n_blk = max(1, min(n_blk, n))
    while n % n_blk != 0:
        n_blk -= 1

    hw_blk = min(int(hw_block), hw) if hw_block else auto_hw
    tiled = hw_blk < hw
    if tiled and hw_blk % 128 != 0:  # lane-align HW tiles (required when not full HW)
        hw_blk = max(128, (hw_blk // 128) * 128)
        if hw_blk >= hw:
            hw_blk, tiled = hw, False

    grid = (n // n_blk,) if not tiled else (n // n_blk, pl.cdiv(hw, hw_blk))

    # ---- explicit VMEM limit: double-buffered x + weights + scratch + headroom ----
    x_bytes = _padded_block_bytes(n_blk, c, hw_blk)
    w_bytes = (_ceil_to(c, 8) * _ceil_to(hidden, 128) + 2 * 8 * _ceil_to(hidden, 128)) * 4
    acc_bytes = _ceil_to(n_blk, 8) * _ceil_to(c, 128) * 4
    vmem_limit = int(min(max(2 * x_bytes + 2 * w_bytes + acc_bytes + (4 << 20), 16 << 20),
                         0.75 * vmem_cap))

    flops = 2 * n * hw * c + 2 * n * c * hidden + 2 * n * hidden
    bytes_accessed = 4 * (x.size + w1_mat.size + 2 * hidden + 1 + n)
    cost = pl.CostEstimate(flops=flops, transcendentals=0, bytes_accessed=bytes_accessed)

    out_sds = jax.ShapeDtypeStruct((n // n_blk, n_blk, 1), jnp.float32)

    def build(single_buffer_weights):
        wt_kw = {"pipeline_mode": pl.Buffered(1)} if single_buffer_weights else {}
        if not tiled:
            kernel = functools.partial(rf_head_kernel_single, inv_hw=1.0 / hw)
            in_specs = [
                pl.BlockSpec((n_blk, c, hw), lambda i: (i, 0, 0)),
                pl.BlockSpec((c, hidden), lambda i: (0, 0), **wt_kw),
                pl.BlockSpec((1, hidden), lambda i: (0, 0), **wt_kw),
                pl.BlockSpec((1, hidden), lambda i: (0, 0), **wt_kw),
                pl.BlockSpec(memory_space=pltpu.MemorySpace.SMEM),
            ]
            out_specs = pl.BlockSpec((1, n_blk, 1), lambda i: (i, 0, 0))
            scratch = []
            dims = ("parallel",)
        else:
            kernel = functools.partial(
                rf_head_kernel_tiled, inv_hw=1.0 / hw, hw_total=hw, hw_blk=hw_blk,
                mask_tail=(hw % hw_blk != 0))
            in_specs = [
                pl.BlockSpec((n_blk, c, hw_blk), lambda i, k: (i, 0, k)),
                pl.BlockSpec((c, hidden), lambda i, k: (0, 0), **wt_kw),
                pl.BlockSpec((1, hidden), lambda i, k: (0, 0), **wt_kw),
                pl.BlockSpec((1, hidden), lambda i, k: (0, 0), **wt_kw),
                pl.BlockSpec(memory_space=pltpu.MemorySpace.SMEM),
            ]
            out_specs = pl.BlockSpec((1, n_blk, 1), lambda i, k: (i, 0, 0))
            scratch = [pltpu.VMEM((n_blk, c), jnp.float32)]
            dims = ("parallel", "arbitrary")
        return pl.pallas_call(
            kernel,
            out_shape=out_sds,
            grid=grid,
            in_specs=in_specs,
            out_specs=out_specs,
            scratch_shapes=scratch,
            compiler_params=pltpu.CompilerParams(
                dimension_semantics=dims, vmem_limit_bytes=vmem_limit),
            cost_estimate=cost,
        )

    args = (x, w1_mat, b1_row, w2_row, b2_s)
    if _BUFFERED_ONE_OK:
        try:
            out = build(True)(*args)
            return out.reshape(n, 1)
        except Exception:
            _BUFFERED_ONE_OK = False  # pl.Buffered(1) unsupported here: default buffering
    out = build(False)(*args)
    return out.reshape(n, 1)


def pure_jax_ref(x_nchw, w1, b1, w2, b2):
    pooled = jnp.mean(x_nchw, axis=(2, 3))                 # (N, C)
    h = pooled @ w1 + b1
    h = jnp.where(h > 0, h, 0.01 * h)
    return h @ w2.reshape(w1.shape[-1], 1) + jnp.asarray(b2).reshape(1)


if __name__ == "__main__":
    # Small shapes consistent with the module (input_channels scaled down from 2048).
    N, C, H, W = 2, 256, 16, 16
    HIDDEN = 256

    key = jax.random.PRNGKey(0)
    kx, k1, kb1, k2, kb2, kx2 = jax.random.split(key, 6)

    x = jax.random.normal(kx, (N, C, H, W), dtype=jnp.float32)
    w1 = jax.random.normal(k1, (C, HIDDEN), dtype=jnp.float32) * (1.0 / jnp.sqrt(C))
    b1 = jax.random.normal(kb1, (HIDDEN,), dtype=jnp.float32) * 0.01
    w2 = jax.random.normal(k2, (HIDDEN, 1), dtype=jnp.float32) * (1.0 / jnp.sqrt(HIDDEN))
    b2 = jax.random.normal(kb2, (1,), dtype=jnp.float32) * 0.01

    ref = pure_jax_ref(x, w1, b1, w2, b2)

    # 1) Auto plan: full-HW contiguous blocks, >= 2 batch blocks (both TCs on v7x).
    out = jax.block_until_ready(rf_classifier_forward(x, w1, b1, w2, b2))
    assert out.shape == (N, 1), out.shape
    assert jnp.allclose(out, ref, atol=1e-4, rtol=1e-4), (out, ref)

    # 2) Forced HW tiling: exercises the accumulator / init / finalize reduction path.
    out_t = jax.block_until_ready(rf_classifier_forward(x, w1, b1, w2, b2, hw_block=128))
    assert jnp.allclose(out_t, ref, atol=1e-4, rtol=1e-4), (out_t, ref)

    # 3) HW not a multiple of the tile (12*12=144 with 128-wide tiles): masked tail block.
    x2 = jax.random.normal(kx2, (N, C, 12, 12), dtype=jnp.float32)
    ref2 = pure_jax_ref(x2, w1, b1, w2, b2)
    out_m = jax.block_until_ready(rf_classifier_forward(x2, w1, b1, w2, b2, hw_block=128))
    assert jnp.allclose(out_m, ref2, atol=1e-4, rtol=1e-4), (out_m, ref2)

    print("KERNEL_OK")
</pallas_src>

<mosaic_0001>
module attributes {stable_mosaic.version = 11 : i64} {
  func.func @rf_head_kernel_single(%arg0: i32, %arg1: memref<1x256x256xf32, #tpu.memory_space<vmem>>, %arg2: memref<256x256xf32, #tpu.memory_space<vmem>>, %arg3: memref<1x256xf32, #tpu.memory_space<vmem>>, %arg4: memref<1x256xf32, #tpu.memory_space<vmem>>, %arg5: memref<1xf32, #tpu.memory_space<smem>>, %arg6: memref<1x1x1xf32, #tpu.memory_space<vmem>>) attributes {dimension_semantics = [#tpu.dimension_semantics<parallel>], iteration_bounds = array<i64: 2>, scalar_prefetch = 0 : i64, scratch_operands = 0 : i64, tpu.core_type = #tpu.core_type<tc>, window_params = [{transform_indices = @transform_0, window_bounds = array<i64: 1, 256, 256>}, {pipeline_mode = #tpu.pipeline_mode<synchronous>, transform_indices = @transform_1, window_bounds = array<i64: 256, 256>}, {pipeline_mode = #tpu.pipeline_mode<synchronous>, transform_indices = @transform_2, window_bounds = array<i64: 1, 256>}, {pipeline_mode = #tpu.pipeline_mode<synchronous>, transform_indices = @transform_3, window_bounds = array<i64: 1, 256>}, {transform_indices = @transform_4, window_bounds = array<i64: 1>}, {transform_indices = @transform_5, window_bounds = array<i64: 1, 1, 1>}]} {
    %c0 = arith.constant 0 : index
    %c0_0 = arith.constant 0 : index
    %c0_1 = arith.constant 0 : index
    %0 = vector.load %arg1[%c0, %c0_0, %c0_1] : memref<1x256x256xf32, #tpu.memory_space<vmem>>, vector<1x256x256xf32>
    %cst = arith.constant dense<0.000000e+00> : vector<1x256xf32>
    %1 = vector.multi_reduction <add>, %0, %cst [2] : vector<1x256x256xf32> to vector<1x256xf32>
    %cst_2 = arith.constant 3.906250e-03 : f32
    %2 = vector.broadcast %cst_2 : f32 to vector<1x256xf32>
    %3 = arith.mulf %1, %2 : vector<1x256xf32>
    %c0_3 = arith.constant 0 : index
    %c0_4 = arith.constant 0 : index
    %4 = vector.load %arg2[%c0_3, %c0_4] : memref<256x256xf32, #tpu.memory_space<vmem>>, vector<256x256xf32>
    %cst_5 = arith.constant dense<0.000000e+00> : vector<1x256xf32>
    %5 = tpu.matmul %3, %4, %cst_5 {dimension_numbers = #tpu.dot_dimension_numbers<[1], [0], [0], [1], [0, 0, 1, 1], [], []>} : vector<1x256xf32>, vector<256x256xf32>, vector<1x256xf32> -> vector<1x256xf32>
    %c0_6 = arith.constant 0 : index
    %c0_7 = arith.constant 0 : index
    %6 = vector.load %arg3[%c0_6, %c0_7] : memref<1x256xf32, #tpu.memory_space<vmem>>, vector<1x256xf32>
    %7 = arith.addf %5, %6 : vector<1x256xf32>
    %cst_8 = arith.constant 0.000000e+00 : f32
    %8 = vector.broadcast %cst_8 : f32 to vector<1x256xf32>
    %9 = arith.cmpf ogt, %7, %8 : vector<1x256xf32>
    %cst_9 = arith.constant 0.00999999977 : f32
    %10 = vector.broadcast %cst_9 : f32 to vector<1x256xf32>
    %11 = arith.mulf %10, %7 : vector<1x256xf32>
    %12 = arith.select %9, %7, %11 : vector<1x256xi1>, vector<1x256xf32>
    %c0_10 = arith.constant 0 : index
    %c0_11 = arith.constant 0 : index
    %13 = vector.load %arg4[%c0_10, %c0_11] : memref<1x256xf32, #tpu.memory_space<vmem>>, vector<1x256xf32>
    %14 = arith.mulf %12, %13 : vector<1x256xf32>
    %cst_12 = arith.constant dense<0.000000e+00> : vector<1xf32>
    %15 = vector.multi_reduction <add>, %14, %cst_12 [1] : vector<1x256xf32> to vector<1xf32>
    %16 = vector.shape_cast %15 : vector<1xf32> to vector<1x1xf32>
    %c0_13 = arith.constant 0 : index
    %17 = memref.load %arg5[%c0_13] : memref<1xf32, #tpu.memory_space<smem>>
    %18 = vector.broadcast %17 : f32 to vector<1x1xf32>
    %19 = arith.addf %16, %18 : vector<1x1xf32>
    %20 = vector.shape_cast %19 : vector<1x1xf32> to vector<1x1x1xf32>
    %c0_14 = arith.constant 0 : index
    %c0_15 = arith.constant 0 : index
    %c0_16 = arith.constant 0 : index
    %21 = vector.load %arg6[%c0_14, %c0_15, %c0_16] : memref<1x1x1xf32, #tpu.memory_space<vmem>>, vector<1x1x1xf32>
    tpu.vector_store %arg6[%c0_14, %c0_15, %c0_16], %20 {strides = array<i32>} : memref<1x1x1xf32, #tpu.memory_space<vmem>>, vector<1x1x1xf32>,
    return
  }
  func.func @transform_0(%arg0: i32) -> (i32, i32, i32) {
    %c0_i32 = arith.constant 0 : i32
    %c0_i32_0 = arith.constant 0 : i32
    %c0_i32_1 = arith.constant 0 : i32
    return %arg0, %c0_i32, %c0_i32_0 : i32, i32, i32
  }
  func.func @transform_1(%arg0: i32) -> (i32, i32) {
    %c0_i32 = arith.constant 0 : i32
    %c0_i32_0 = arith.constant 0 : i32
    %c0_i32_1 = arith.constant 0 : i32
    return %c0_i32, %c0_i32_0 : i32, i32
  }
  func.func @transform_2(%arg0: i32) -> (i32, i32) {
    %c0_i32 = arith.constant 0 : i32
    %c0_i32_0 = arith.constant 0 : i32
    %c0_i32_1 = arith.constant 0 : i32
    return %c0_i32, %c0_i32_0 : i32, i32
  }
  func.func @transform_3(%arg0: i32) -> (i32, i32) {
    %c0_i32 = arith.constant 0 : i32
    %c0_i32_0 = arith.constant 0 : i32
    %c0_i32_1 = arith.constant 0 : i32
    return %c0_i32, %c0_i32_0 : i32, i32
  }
  func.func @transform_4(%arg0: i32) -> i32 {
    %c0_i32 = arith.constant 0 : i32
    %c0_i32_0 = arith.constant 0 : i32
    return %c0_i32 : i32
  }
  func.func @transform_5(%arg0: i32) -> (i32, i32, i32) {
    %c0_i32 = arith.constant 0 : i32
    %c0_i32_0 = arith.constant 0 : i32
    %c0_i32_1 = arith.constant 0 : i32
    return %arg0, %c0_i32, %c0_i32_0 : i32, i32, i32
  }
}

module attributes {stable_mosaic.version = 11 : i64} {
  func.func @rf_head_kernel_single(%arg0: i32, %arg1: memref<1x256x256xf32, #tpu.memory_space<vmem>>, %arg2: memref<256x256xf32, #tpu.memory_space<vmem>>, %arg3: memref<1x256xf32, #tpu.memory_space<vmem>>, %arg4: memref<1x256xf32, #tpu.memory_space<vmem>>, %arg5: memref<1xf32, #tpu.memory_space<smem>>, %arg6: memref<1x1x1xf32, #tpu.memory_space<vmem>>) attributes {dimension_semantics = [#tpu.dimension_semantics<parallel>], iteration_bounds = array<i64: 2>, scalar_prefetch = 0 : i64, scratch_operands = 0 : i64, tpu.core_type = #tpu.core_type<tc>, window_params = [{transform_indices = @transform_0, window_bounds = array<i64: 1, 256, 256>}, {pipeline_mode = #tpu.pipeline_mode<synchronous>, transform_indices = @transform_1, window_bounds = array<i64: 256, 256>}, {pipeline_mode = #tpu.pipeline_mode<synchronous>, transform_indices = @transform_2, window_bounds = array<i64: 1, 256>}, {pipeline_mode = #tpu.pipeline_mode<synchronous>, transform_indices = @transform_3, window_bounds = array<i64: 1, 256>}, {transform_indices = @transform_4, window_bounds = array<i64: 1>}, {transform_indices = @transform_5, window_bounds = array<i64: 1, 1, 1>}]} {
    %c0 = arith.constant 0 : index
    %c0_0 = arith.constant 0 : index
    %c0_1 = arith.constant 0 : index
    %0 = vector.load %arg1[%c0, %c0_0, %c0_1] : memref<1x256x256xf32, #tpu.memory_space<vmem>>, vector<1x256x256xf32>
    %cst = arith.constant dense<0.000000e+00> : vector<1x256xf32>
    %1 = vector.multi_reduction <add>, %0, %cst [2] : vector<1x256x256xf32> to vector<1x256xf32>
    %cst_2 = arith.constant 3.906250e-03 : f32
    %2 = vector.broadcast %cst_2 : f32 to vector<1x256xf32>
    %3 = arith.mulf %1, %2 : vector<1x256xf32>
    %c0_3 = arith.constant 0 : index
    %c0_4 = arith.constant 0 : index
    %4 = vector.load %arg2[%c0_3, %c0_4] : memref<256x256xf32, #tpu.memory_space<vmem>>, vector<256x256xf32>
    %cst_5 = arith.constant dense<0.000000e+00> : vector<1x256xf32>
    %5 = tpu.matmul %3, %4, %cst_5 {dimension_numbers = #tpu.dot_dimension_numbers<[1], [0], [0], [1], [0, 0, 1, 1], [], []>} : vector<1x256xf32>, vector<256x256xf32>, vector<1x256xf32> -> vector<1x256xf32>
    %c0_6 = arith.constant 0 : index
    %c0_7 = arith.constant 0 : index
    %6 = vector.load %arg3[%c0_6, %c0_7] : memref<1x256xf32, #tpu.memory_space<vmem>>, vector<1x256xf32>
    %7 = arith.addf %5, %6 : vector<1x256xf32>
    %cst_8 = arith.constant 0.000000e+00 : f32
    %8 = vector.broadcast %cst_8 : f32 to vector<1x256xf32>
    %9 = arith.cmpf ogt, %7, %8 : vector<1x256xf32>
    %cst_9 = arith.constant 0.00999999977 : f32
    %10 = vector.broadcast %cst_9 : f32 to vector<1x256xf32>
    %11 = arith.mulf %10, %7 : vector<1x256xf32>
    %12 = arith.select %9, %7, %11 : vector<1x256xi1>, vector<1x256xf32>
    %c0_10 = arith.constant 0 : index
    %c0_11 = arith.constant 0 : index
    %13 = vector.load %arg4[%c0_10, %c0_11] : memref<1x256xf32, #tpu.memory_space<vmem>>, vector<1x256xf32>
    %14 = arith.mulf %12, %13 : vector<1x256xf32>
    %cst_12 = arith.constant dense<0.000000e+00> : vector<1xf32>
    %15 = vector.multi_reduction <add>, %14, %cst_12 [1] : vector<1x256xf32> to vector<1xf32>
    %16 = vector.shape_cast %15 : vector<1xf32> to vector<1x1xf32>
    %c0_13 = arith.constant 0 : index
    %17 = memref.load %arg5[%c0_13] : memref<1xf32, #tpu.memory_space<smem>>
    %18 = vector.broadcast %17 : f32 to vector<1x1xf32>
    %19 = arith.addf %16, %18 : vector<1x1xf32>
    %20 = vector.shape_cast %19 : vector<1x1xf32> to vector<1x1x1xf32>
    %c0_14 = arith.constant 0 : index
    %c0_15 = arith.constant 0 : index
    %c0_16 = arith.constant 0 : index
    %21 = vector.load %arg6[%c0_14, %c0_15, %c0_16] : memref<1x1x1xf32, #tpu.memory_space<vmem>>, vector<1x1x1xf32>
    tpu.vector_store %arg6[%c0_14, %c0_15, %c0_16], %20 {strides = array<i32>} : memref<1x1x1xf32, #tpu.memory_space<vmem>>, vector<1x1x1xf32>,
    return
  }
  func.func @transform_0(%arg0: i32) -> (i32, i32, i32) {
    %c0_i32 = arith.constant 0 : i32
    %c0_i32_0 = arith.constant 0 : i32
    %c0_i32_1 = arith.constant 0 : i32
    return %arg0, %c0_i32, %c0_i32_0 : i32, i32, i32
  }
  func.func @transform_1(%arg0: i32) -> (i32, i32) {
    %c0_i32 = arith.constant 0 : i32
    %c0_i32_0 = arith.constant 0 : i32
    %c0_i32_1 = arith.constant 0 : i32
    return %c0_i32, %c0_i32_0 : i32, i32
  }
  func.func @transform_2(%arg0: i32) -> (i32, i32) {
    %c0_i32 = arith.constant 0 : i32
    %c0_i32_0 = arith.constant 0 : i32
    %c0_i32_1 = arith.constant 0 : i32
    return %c0_i32, %c0_i32_0 : i32, i32
  }
  func.func @transform_3(%arg0: i32) -> (i32, i32) {
    %c0_i32 = arith.constant 0 : i32
    %c0_i32_0 = arith.constant 0 : i32
    %c0_i32_1 = arith.constant 0 : i32
    return %c0_i32, %c0_i32_0 : i32, i32
  }
  func.func @transform_4(%arg0: i32) -> i32 {
    %c0_i32 = arith.constant 0 : i32
    %c0_i32_0 = arith.constant 0 : i32
    return %c0_i32 : i32
  }
  func.func @transform_5(%arg0: i32) -> (i32, i32, i32) {
    %c0_i32 = arith.constant 0 : i32
    %c0_i32_0 = arith.constant 0 : i32
    %c0_i32_1 = arith.constant 0 : i32
    return %arg0, %c0_i32, %c0_i32_0 : i32, i32, i32
  }
}

</mosaic_0001>

<llo_original>
// kernel: tpu_custom_call.1
$region0: #{tpu_custom_call.1}
  #allocation0 [shape = 'u32[]', space=smem, size = 0x4, offset = 0x4, fixed_abs, tag = 'smem constant byte address 0x4 - core index']
  #allocation1 [shape = 'u32[72,128]{1,0:T(1,128)}', space=vmem, size = 0x9000, scoped, tag = 'internal scratch']
  #allocation2 [shape = 'f32[1]{0:T(128)S(6)}', space=smem, size = 0x200, scoped, tag = 'scoped memory for tpu_custom_call.1']
  %s0 = inlined_call_operand.hbm [shape: f32[2,256,256], index: 0, kind: input, shape index: {}]
  %s1 = inlined_call_operand.hbm [shape: f32[256,256], index: 1, kind: input, shape index: {}]
  %s2 = inlined_call_operand.vmem [shape: f32[1,256], index: 2, kind: input, shape index: {}]
  %s3 = inlined_call_operand.vmem [shape: f32[1,256], index: 3, kind: input, shape index: {}]
  %s4 = inlined_call_operand.<no memory space> [shape: f32[1], index: 4, kind: input, shape index: {}]
  %s5 = inlined_call_operand.vmem [shape: f32[2,1,1], index: 5, kind: output, shape index: {}]
  %s6 = sld [smem:[#allocation0]]
  $region61: #{tpu_custom_call.1} parent=0
    _
  %s8 = ssub.s32 1, %s6
  %s9 = scalar_select 0, %s8, %s6
  %10 = sst [smem:[#allocation2]] %s4
  $region1: #{tpu_custom_call.1} parent=0
    #allocation3 [shape = 'u8[524288]{0}', space=vmem, size = 0x80000, scoped, tag = 'input window, operand 0']
    #allocation4 [shape = 's32[2]{0}', space=sflag, size = 0x8, scoped, tag = 'scoped memory for tpu_custom_call.1']
    #allocation5 [shape = 'u8[262144]{0}', space=vmem, size = 0x40000, scoped, tag = 'input window, operand 1, single buffered']
    #allocation6 [shape = 's32[1]{0}', space=sflag, size = 0x4, scoped, tag = 'scoped memory for tpu_custom_call.1']
    %11 = vsyncpa [#allocation4], 0
    %s12 = scalar_lea.sflag [#allocation4], 1
    %13 = vsyncpa %s12, 0
    %14 = vsyncpa [#allocation6], 0
    loop: start=0, step=1, limit=4
    $region2: #{tpu_custom_call.1} parent=1 // loop_pre_header
      _
    $region3: #{tpu_custom_call.1} parent=1 // loop_header
      %s16 = sphi 0, %s20
      %p17 = scmp.ge.s32.totalorder %s16, 4
      %s26 = sphi 0, %s28
      %s29 = sphi 0, %s26
      %s30 = sphi 0, %s29
      %s46 = sphi 0, %s30
      %s50 = sphi 0, %s50
      %s52 = sphi 0, %s50
      %s53 = sphi 0, %s52
      %s67 = sphi 0, %s53
      %s71 = sphi 0, %s71
      %s73 = sphi 0, %s71
      %s74 = sphi 0, %s73
      %s88 = sphi 0, %s74
      %s92 = sphi 0, %s92
      %s94 = sphi 0, %s92
      %s95 = sphi 0, %s94
      %s109 = sphi 0, %s95
      %s113 = sphi 0, %s113
      %s115 = sphi 0, %s113
      %s116 = sphi 0, %s115
      %s130 = sphi 0, %s116
      %s136 = sphi 0, %s138
      %s139 = sphi 0, %s136
      %s140 = sphi 0, %s139
      %s156 = sphi 0, %s140
    $region4: #{tpu_custom_call.1} parent=1 // loop_header_branch
      %19 = sbr.rel (%p17) target = $region8
    $region5: #{tpu_custom_call.1} parent=1 // loop_body
      %s21 = ssub.s32 %s16, 1
      %s22 = ssub.s32 %s16, 2
      %s23 = sadd.s32 %s16, 1
      %s24 = ssub.s32 %s16, %s23
      %p25 = scmp.eq.s32.totalorder %s24, 0
      %s27 = sadd.s32 %s26, 1
      %s28 = scalar_select %p25, %s26, %s27
      %p31 = pneg %p25
      %p32 = scmp.eq.s32.totalorder %s16, 1
      %p33 = por %p31, %p32
      %p34 = scmp.ne.s32.totalorder %s26, %s29
      %p35 = scmp.eq.s32.totalorder %s16, 0
      %p36 = por %p34, %p35
      %p37 = scmp.ne.s32.totalorder %s26, %s29
      %p38 = scmp.eq.s32.totalorder %s21, 1
      %p39 = por %p37, %p38
      %p40 = scmp.ne.s32.totalorder %s29, %s30
      %p41 = scmp.eq.s32.totalorder %s21, 0
      %p42 = por %p40, %p41
      %p43 = scmp.ne.s32.totalorder %s29, %s30
      %p44 = scmp.eq.s32.totalorder %s22, 1
      %p45 = por %p43, %p44
      %p47 = scmp.ne.s32.totalorder %s30, %s46
      %p48 = scmp.eq.s32.totalorder %s22, 0
      %p49 = por %p47, %p48
      %s51 = sadd.s32 %s50, 1
      %p54 = scmp.eq.s32.totalorder %s16, 1
      %p55 = scmp.ne.s32.totalorder %s50, %s52
      %p56 = scmp.eq.s32.totalorder %s16, 0
      %p57 = por %p55, %p56
      %p58 = scmp.ne.s32.totalorder %s50, %s52
      %p59 = scmp.eq.s32.totalorder %s21, 1
      %p60 = por %p58, %p59
      %p61 = scmp.ne.s32.totalorder %s52, %s53
      %p62 = scmp.eq.s32.totalorder %s21, 0
      %p63 = por %p61, %p62
      %p64 = scmp.ne.s32.totalorder %s52, %s53
      %p65 = scmp.eq.s32.totalorder %s22, 1
      %p66 = por %p64, %p65
      %p68 = scmp.ne.s32.totalorder %s53, %s67
      %p69 = scmp.eq.s32.totalorder %s22, 0
      %p70 = por %p68, %p69
      %s72 = sadd.s32 %s71, 1
      %p75 = scmp.eq.s32.totalorder %s16, 1
      %p76 = scmp.ne.s32.totalorder %s71, %s73
      %p77 = scmp.eq.s32.totalorder %s16, 0
      %p78 = por %p76, %p77
      %p79 = scmp.ne.s32.totalorder %s71, %s73
      %p80 = scmp.eq.s32.totalorder %s21, 1
      %p81 = por %p79, %p80
      %p82 = scmp.ne.s32.totalorder %s73, %s74
      %p83 = scmp.eq.s32.totalorder %s21, 0
      %p84 = por %p82, %p83
      %p85 = scmp.ne.s32.totalorder %s73, %s74
      %p86 = scmp.eq.s32.totalorder %s22, 1
      %p87 = por %p85, %p86
      %p89 = scmp.ne.s32.totalorder %s74, %s88
      %p90 = scmp.eq.s32.totalorder %s22, 0
      %p91 = por %p89, %p90
      %s93 = sadd.s32 %s92, 1
      %p96 = scmp.eq.s32.totalorder %s16, 1
      %p97 = scmp.ne.s32.totalorder %s92, %s94
      %p98 = scmp.eq.s32.totalorder %s16, 0
      %p99 = por %p97, %p98
      %p100 = scmp.ne.s32.totalorder %s92, %s94
      %p101 = scmp.eq.s32.totalorder %s21, 1
      %p102 = por %p100, %p101
      %p103 = scmp.ne.s32.totalorder %s94, %s95
      %p104 = scmp.eq.s32.totalorder %s21, 0
      %p105 = por %p103, %p104
      %p106 = scmp.ne.s32.totalorder %s94, %s95
      %p107 = scmp.eq.s32.totalorder %s22, 1
      %p108 = por %p106, %p107
      %p110 = scmp.ne.s32.totalorder %s95, %s109
      %p111 = scmp.eq.s32.totalorder %s22, 0
      %p112 = por %p110, %p111
      %s114 = sadd.s32 %s113, 1
      %p117 = scmp.eq.s32.totalorder %s16, 1
      %p118 = scmp.ne.s32.totalorder %s113, %s115
      %p119 = scmp.eq.s32.totalorder %s16, 0
      %p120 = por %p118, %p119
      %p121 = scmp.ne.s32.totalorder %s113, %s115
      %p122 = scmp.eq.s32.totalorder %s21, 1
      %p123 = por %p121, %p122
      %p124 = scmp.ne.s32.totalorder %s115, %s116
      %p125 = scmp.eq.s32.totalorder %s21, 0
      %p126 = por %p124, %p125
      %p127 = scmp.ne.s32.totalorder %s115, %s116
      %p128 = scmp.eq.s32.totalorder %s22, 1
      %p129 = por %p127, %p128
      %p131 = scmp.ne.s32.totalorder %s116, %s130
      %p132 = scmp.eq.s32.totalorder %s22, 0
      %p133 = por %p131, %p132
      %s134 = ssub.s32 %s16, %s23
      %p135 = scmp.eq.s32.totalorder %s134, 0
      %s137 = sadd.s32 %s136, 1
      %s138 = scalar_select %p135, %s136, %s137
      %p141 = pneg %p135
      %p142 = scmp.eq.s32.totalorder %s16, 1
      %p143 = por %p141, %p142
      %p144 = scmp.ne.s32.totalorder %s136, %s139
      %p145 = scmp.eq.s32.totalorder %s16, 0
      %p146 = por %p144, %p145
      %p147 = scmp.ne.s32.totalorder %s136, %s139
      %p148 = scmp.eq.s32.totalorder %s21, 1
      %p149 = por %p147, %p148
      %p150 = scmp.ne.s32.totalorder %s139, %s140
      %p151 = scmp.eq.s32.totalorder %s21, 0
      %p152 = por %p150, %p151
      %p153 = scmp.ne.s32.totalorder %s139, %s140
      %p154 = scmp.eq.s32.totalorder %s22, 1
      %p155 = por %p153, %p154
      %p157 = scmp.ne.s32.totalorder %s140, %s156
      %p158 = scmp.eq.s32.totalorder %s22, 0
      %p159 = por %p157, %p158
      %p160 = scmp.le.s32.totalorder 1, %s16
      %p161 = scmp.lt.s32.totalorder %s16, 3
      %p162 = pnand %p160, %p161
      %p163 = pneg %p162
      // Predicated region
      $region9: #{tpu_custom_call.1} parent=5 // pred_check
        _
      $region10: #{tpu_custom_call.1} parent=5 // pred_check_branch
        %165 = sbr.rel (%p162) target = $region12
      $region11: #{tpu_custom_call.1} parent=5 // pred_region
        %s166 = ssub.s32 %s16, 1
        // Predicated region
        $region13: #{tpu_custom_call.1} parent=11 // pred_check
          %p167 = pneg %p63
        $region14: #{tpu_custom_call.1} parent=11 // pred_check_branch
          %169 = sbr.rel (%p167) target = $region16
        $region15: #{tpu_custom_call.1} parent=11 // pred_region
          %171 = vsyncadd [#allocation6], 0
          %s172 = sshll.u32 %s1, 4
          %s173 = int_to_ptr.hbm [resolvable:$true] %s172
          %s174 = sshll.u32 [#allocation5], 4
          %s175 = int_to_ptr.vmem [resolvable:$true] %s174
          %180 = dma.hbm_to_vmem [thread:$0]  %s173, 8192, %s175, [#allocation6], 256, 256, 16
        $region16: #{tpu_custom_call.1} parent=11 // pred_fallthru
          _
        // Predicated region
        $region17: #{tpu_custom_call.1} parent=11 // pred_check
          %p181 = pneg %p84
        $region18: #{tpu_custom_call.1} parent=11 // pred_check_branch
          %183 = sbr.rel (%p181) target = $region20
        $region19: #{tpu_custom_call.1} parent=11 // pred_region
          _
        $region20: #{tpu_custom_call.1} parent=11 // pred_fallthru
          _
        // Predicated region
        $region21: #{tpu_custom_call.1} parent=11 // pred_check
          %p184 = pneg %p105
        $region22: #{tpu_custom_call.1} parent=11 // pred_check_branch
          %186 = sbr.rel (%p184) target = $region24
        $region23: #{tpu_custom_call.1} parent=11 // pred_region
          _
        $region24: #{tpu_custom_call.1} parent=11 // pred_fallthru
          _
        // Predicated region
        $region25: #{tpu_custom_call.1} parent=11 // pred_check
          %p187 = pneg %p126
        $region26: #{tpu_custom_call.1} parent=11 // pred_check_branch
          %189 = sbr.rel (%p187) target = $region28
        $region27: #{tpu_custom_call.1} parent=11 // pred_region
          _
        $region28: #{tpu_custom_call.1} parent=11 // pred_fallthru
          _
      $region12: #{tpu_custom_call.1} parent=5 // pred_fallthru
        _
      %p190 = scmp.lt.s32.totalorder %s16, 2
      // Predicated region
      $region29: #{tpu_custom_call.1} parent=5 // pred_check
        %p191 = pneg %p190
      $region30: #{tpu_custom_call.1} parent=5 // pred_check_branch
        %193 = sbr.rel (%p191) target = $region32
      $region31: #{tpu_custom_call.1} parent=5 // pred_region
        // Predicated region
        $region33: #{tpu_custom_call.1} parent=31 // pred_check
          %p194 = pneg %p36
        $region34: #{tpu_custom_call.1} parent=31 // pred_check_branch
          %196 = sbr.rel (%p194) target = $region36
        $region35: #{tpu_custom_call.1} parent=31 // pred_region
          %s197 = sand.u32 %s26, 1
          %s198 = scalar_lea.sflag [#allocation4], %s197
          %s199 = sand.u32 %s26, 1
          %s200 = smul.addr %s199, 512
          %s201 = scalar_lea.vmem [#allocation3], %s200
          %203 = vsyncadd %s198, 0
          %s204 = smul.addr %s16, 64
          %s205 = smul.addr %s204, 8
          %s206 = scalar_lea.hbm %s0, %s205
          %s207 = sshll.u32 %s206, 4
          %s208 = int_to_ptr.hbm [resolvable:$true] %s207
          %s209 = sshll.u32 %s201, 4
          %s210 = int_to_ptr.vmem [resolvable:$true] %s209
          %215 = dma.hbm_to_vmem [thread:$0]  %s208, 8192, %s210, %s198, 256, 256, 16
        $region36: #{tpu_custom_call.1} parent=31 // pred_fallthru
          _
      $region32: #{tpu_custom_call.1} parent=5 // pred_fallthru
        _
      %p216 = scmp.le.s32.totalorder 1, %s16
      %p217 = scmp.lt.s32.totalorder %s16, 3
      %p218 = pnand %p216, %p217
      %p219 = pneg %p218
      // Predicated region
      $region37: #{tpu_custom_call.1} parent=5 // pred_check
        _
      $region38: #{tpu_custom_call.1} parent=5 // pred_check_branch
        %221 = sbr.rel (%p218) target = $region40
      $region39: #{tpu_custom_call.1} parent=5 // pred_region
        %s222 = ssub.s32 %s16, 1
        %s223 = sand.u32 %s29, 1
        %s224 = scalar_lea.sflag [#allocation4], %s223
        %s225 = sand.u32 %s29, 1
        %s226 = smul.addr %s225, 512
        %s227 = scalar_lea.vmem [#allocation3], %s226
        // Predicated region
        $region41: #{tpu_custom_call.1} parent=39 // pred_check
          %p228 = pneg %p42
        $region42: #{tpu_custom_call.1} parent=39 // pred_check_branch
          %230 = sbr.rel (%p228) target = $region44
        $region43: #{tpu_custom_call.1} parent=39 // pred_region
          %232 = dma.done %s224, 8192
        $region44: #{tpu_custom_call.1} parent=39 // pred_fallthru
          _
        // Predicated region
        $region45: #{tpu_custom_call.1} parent=39 // pred_check
          %p233 = pneg %p63
        $region46: #{tpu_custom_call.1} parent=39 // pred_check_branch
          %235 = sbr.rel (%p233) target = $region48
        $region47: #{tpu_custom_call.1} parent=39 // pred_region
          %237 = dma.done [#allocation6], 8192
        $region48: #{tpu_custom_call.1} parent=39 // pred_fallthru
          _
        %s238 = sand.u32 %s29, 1
        %s239 = scalar_lea.sflag [#allocation4], %s238
        %s240 = sand.u32 %s29, 1
        %s241 = smul.addr %s240, 512
        %s242 = scalar_lea.vmem [#allocation3], %s241
        %p243 = pneg %p42
        %p244 = pneg %p39
        %p245 = pneg %p63
        %p246 = pneg %p60
        %p247 = pneg %p84
        %p248 = pneg %p81
        %p249 = pneg %p105
        %p250 = pneg %p102
        %p251 = pneg %p126
        %p252 = pneg %p123
        %p253 = pneg %p152
        %p254 = pneg %p149
        %p255 = scmp.lt.s32.totalorder %s21, 1
        %s256 = scalar_select %p255, %s21, 1
        %s257 = scalar_lea.vmem %s5, %s256
        %p258 = scmp.lt.s32.totalorder %s21, 1
        %s259 = scalar_select %p258, %s21, 1
        %s260 = scalar_lea.vmem %s5, %s259
        %v261 = vld [vmem:[%s227] sm:$0xff]
        %v262 = vld [vmem:[%s227 + $0x8] sm:$0xff]
        %v263 = vld [vmem:[%s227 + $0x10] sm:$0xff]
        %v264 = vld [vmem:[%s227 + $0x18] sm:$0xff]
        %v265 = vld [vmem:[%s227 + $0x20] sm:$0xff]
        %v266 = vld [vmem:[%s227 + $0x28] sm:$0xff]
        %v267 = vld [vmem:[%s227 + $0x30] sm:$0xff]
        %v268 = vld [vmem:[%s227 + $0x38] sm:$0xff]
        %v269 = vld [vmem:[%s227 + $0x40] sm:$0xff]
        %v270 = vld [vmem:[%s227 + $0x48] sm:$0xff]
        %v271 = vld [vmem:[%s227 + $0x50] sm:$0xff]
        %v272 = vld [vmem:[%s227 + $0x58] sm:$0xff]
        %v273 = vld [vmem:[%s227 + $0x60] sm:$0xff]
        %v274 = vld [vmem:[%s227 + $0x68] sm:$0xff]
        %v275 = vld [vmem:[%s227 + $0x70] sm:$0xff]
        %v276 = vld [vmem:[%s227 + $0x78] sm:$0xff]
        %v277 = vld [vmem:[%s227 + $0x80] sm:$0xff]
        %v278 = vld [vmem:[%s227 + $0x88] sm:$0xff]
        %v279 = vld [vmem:[%s227 + $0x90] sm:$0xff]
        %v280 = vld [vmem:[%s227 + $0x98] sm:$0xff]
        %v281 = vld [vmem:[%s227 + $0xa0] sm:$0xff]
        %v282 = vld [vmem:[%s227 + $0xa8] sm:$0xff]
        %v283 = vld [vmem:[%s227 + $0xb0] sm:$0xff]
        %v284 = vld [vmem:[%s227 + $0xb8] sm:$0xff]
        %v285 = vld [vmem:[%s227 + $0xc0] sm:$0xff]
        %v286 = vld [vmem:[%s227 + $0xc8] sm:$0xff]
        %v287 = vld [vmem:[%s227 + $0xd0] sm:$0xff]
        %v288 = vld [vmem:[%s227 + $0xd8] sm:$0xff]
        %v289 = vld [vmem:[%s227 + $0xe0] sm:$0xff]
        %v290 = vld [vmem:[%s227 + $0xe8] sm:$0xff]
        %v291 = vld [vmem:[%s227 + $0xf0] sm:$0xff]
        %v292 = vld [vmem:[%s227 + $0xf8] sm:$0xff]
        %v293 = vld [vmem:[%s227 + $0x100] sm:$0xff]
        %v294 = vld [vmem:[%s227 + $0x108] sm:$0xff]
        %v295 = vld [vmem:[%s227 + $0x110] sm:$0xff]
        %v296 = vld [vmem:[%s227 + $0x118] sm:$0xff]
        %v297 = vld [vmem:[%s227 + $0x120] sm:$0xff]
        %v298 = vld [vmem:[%s227 + $0x128] sm:$0xff]
        %v299 = vld [vmem:[%s227 + $0x130] sm:$0xff]
        %v300 = vld [vmem:[%s227 + $0x138] sm:$0xff]
        %v301 = vld [vmem:[%s227 + $0x140] sm:$0xff]
        %v302 = vld [vmem:[%s227 + $0x148] sm:$0xff]
        %v303 = vld [vmem:[%s227 + $0x150] sm:$0xff]
        %v304 = vld [vmem:[%s227 + $0x158] sm:$0xff]
        %v305 = vld [vmem:[%s227 + $0x160] sm:$0xff]
        %v306 = vld [vmem:[%s227 + $0x168] sm:$0xff]
        %v307 = vld [vmem:[%s227 + $0x170] sm:$0xff]
        %v308 = vld [vmem:[%s227 + $0x178] sm:$0xff]
        %v309 = vld [vmem:[%s227 + $0x180] sm:$0xff]
        %v310 = vld [vmem:[%s227 + $0x188] sm:$0xff]
        %v311 = vld [vmem:[%s227 + $0x190] sm:$0xff]
        %v312 = vld [vmem:[%s227 + $0x198] sm:$0xff]
        %v313 = vld [vmem:[%s227 + $0x1a0] sm:$0xff]
        %v314 = vld [vmem:[%s227 + $0x1a8] sm:$0xff]
        %v315 = vld [vmem:[%s227 + $0x1b0] sm:$0xff]
        %v316 = vld [vmem:[%s227 + $0x1b8] sm:$0xff]
        %v317 = vld [vmem:[%s227 + $0x1c0] sm:$0xff]
        %v318 = vld [vmem:[%s227 + $0x1c8] sm:$0xff]
        %v319 = vld [vmem:[%s227 + $0x1d0] sm:$0xff]
        %v320 = vld [vmem:[%s227 + $0x1d8] sm:$0xff]
        %v321 = vld [vmem:[%s227 + $0x1e0] sm:$0xff]
        %v322 = vld [vmem:[%s227 + $0x1e8] sm:$0xff]
        %v323 = vld [vmem:[%s227 + $0x1f0] sm:$0xff]
        %v324 = vld [vmem:[%s227 + $0x1f8] sm:$0xff]
        %v325 = vadd.f32 %v261, %v262
        %326 = vadd.xlane.f32.xlu0 %v325
        %v327 = vpop.xlane.xlu0 %326
        %v328 = vadd.f32 %v263, %v264
        %329 = vadd.xlane.f32.xlu0 %v328
        %v330 = vpop.xlane.xlu0 %329
        %v331 = vadd.f32 %v265, %v266
        %332 = vadd.xlane.f32.xlu0 %v331
        %v333 = vpop.xlane.xlu0 %332
        %v334 = vadd.f32 %v267, %v268
        %335 = vadd.xlane.f32.xlu0 %v334
        %v336 = vpop.xlane.xlu0 %335
        %v337 = vadd.f32 %v269, %v270
        %338 = vadd.xlane.f32.xlu0 %v337
        %v339 = vpop.xlane.xlu0 %338
        %v340 = vadd.f32 %v271, %v272
        %341 = vadd.xlane.f32.xlu0 %v340
        %v342 = vpop.xlane.xlu0 %341
        %v343 = vadd.f32 %v273, %v274
        %344 = vadd.xlane.f32.xlu0 %v343
        %v345 = vpop.xlane.xlu0 %344
        %v346 = vadd.f32 %v275, %v276
        %347 = vadd.xlane.f32.xlu0 %v346
        %v348 = vpop.xlane.xlu0 %347
        %v349 = vadd.f32 %v277, %v278
        %350 = vadd.xlane.f32.xlu0 %v349
        %v351 = vpop.xlane.xlu0 %350
        %v352 = vadd.f32 %v279, %v280
        %353 = vadd.xlane.f32.xlu0 %v352
        %v354 = vpop.xlane.xlu0 %353
        %v355 = vadd.f32 %v281, %v282
        %356 = vadd.xlane.f32.xlu0 %v355
        %v357 = vpop.xlane.xlu0 %356
        %v358 = vadd.f32 %v283, %v284
        %359 = vadd.xlane.f32.xlu0 %v358
        %v360 = vpop.xlane.xlu0 %359
        %v361 = vadd.f32 %v285, %v286
        %362 = vadd.xlane.f32.xlu0 %v361
        %v363 = vpop.xlane.xlu0 %362
        %v364 = vadd.f32 %v287, %v288
        %365 = vadd.xlane.f32.xlu0 %v364
        %v366 = vpop.xlane.xlu0 %365
        %v367 = vadd.f32 %v289, %v290
        %368 = vadd.xlane.f32.xlu0 %v367
        %v369 = vpop.xlane.xlu0 %368
        %v370 = vadd.f32 %v291, %v292
        %371 = vadd.xlane.f32.xlu0 %v370
        %v372 = vpop.xlane.xlu0 %371
        %v373 = vadd.f32 %v293, %v294
        %374 = vadd.xlane.f32.xlu0 %v373
        %v375 = vpop.xlane.xlu0 %374
        %v376 = vadd.f32 %v295, %v296
        %377 = vadd.xlane.f32.xlu0 %v376
        %v378 = vpop.xlane.xlu0 %377
        %v379 = vadd.f32 %v297, %v298
        %380 = vadd.xlane.f32.xlu0 %v379
        %v381 = vpop.xlane.xlu0 %380
        %v382 = vadd.f32 %v299, %v300
        %383 = vadd.xlane.f32.xlu0 %v382
        %v384 = vpop.xlane.xlu0 %383
        %v385 = vadd.f32 %v301, %v302
        %386 = vadd.xlane.f32.xlu0 %v385
        %v387 = vpop.xlane.xlu0 %386
        %v388 = vadd.f32 %v303, %v304
        %389 = vadd.xlane.f32.xlu0 %v388
        %v390 = vpop.xlane.xlu0 %389
        %v391 = vadd.f32 %v305, %v306
        %392 = vadd.xlane.f32.xlu0 %v391
        %v393 = vpop.xlane.xlu0 %392
        %v394 = vadd.f32 %v307, %v308
        %395 = vadd.xlane.f32.xlu0 %v394
        %v396 = vpop.xlane.xlu0 %395
        %v397 = vadd.f32 %v309, %v310
        %398 = vadd.xlane.f32.xlu0 %v397
        %v399 = vpop.xlane.xlu0 %398
        %v400 = vadd.f32 %v311, %v312
        %401 = vadd.xlane.f32.xlu0 %v400
        %v402 = vpop.xlane.xlu0 %401
        %v403 = vadd.f32 %v313, %v314
        %404 = vadd.xlane.f32.xlu0 %v403
        %v405 = vpop.xlane.xlu0 %404
        %v406 = vadd.f32 %v315, %v316
        %407 = vadd.xlane.f32.xlu0 %v406
        %v408 = vpop.xlane.xlu0 %407
        %v409 = vadd.f32 %v317, %v318
        %410 = vadd.xlane.f32.xlu0 %v409
        %v411 = vpop.xlane.xlu0 %410
        %v412 = vadd.f32 %v319, %v320
        %413 = vadd.xlane.f32.xlu0 %v412
        %v414 = vpop.xlane.xlu0 %413
        %v415 = vadd.f32 %v321, %v322
        %416 = vadd.xlane.f32.xlu0 %v415
        %v417 = vpop.xlane.xlu0 %416
        %v418 = vadd.f32 %v323, %v324
        %419 = vadd.xlane.f32.xlu0 %v418
        %v420 = vpop.xlane.xlu0 %419
        %v421 = vmul.f32 %v327, 0.00390625
        %v422 = vmul.f32 %v330, 0.00390625
        %v423 = vmul.f32 %v333, 0.00390625
        %v424 = vmul.f32 %v336, 0.00390625
        %v425 = vmul.f32 %v339, 0.00390625
        %v426 = vmul.f32 %v342, 0.00390625
        %v427 = vmul.f32 %v345, 0.00390625
        %v428 = vmul.f32 %v348, 0.00390625
        %v429 = vmul.f32 %v351, 0.00390625
        %v430 = vmul.f32 %v354, 0.00390625
        %v431 = vmul.f32 %v357, 0.00390625
        %v432 = vmul.f32 %v360, 0.00390625
        %v433 = vmul.f32 %v363, 0.00390625
        %v434 = vmul.f32 %v366, 0.00390625
        %v435 = vmul.f32 %v369, 0.00390625
        %v436 = vmul.f32 %v372, 0.00390625
        %v437 = vmul.f32 %v375, 0.00390625
        %v438 = vmul.f32 %v378, 0.00390625
        %v439 = vmul.f32 %v381, 0.00390625
        %v440 = vmul.f32 %v384, 0.00390625
        %v441 = vmul.f32 %v387, 0.00390625
        %v442 = vmul.f32 %v390, 0.00390625
        %v443 = vmul.f32 %v393, 0.00390625
        %v444 = vmul.f32 %v396, 0.00390625
        %v445 = vmul.f32 %v399, 0.00390625
        %v446 = vmul.f32 %v402, 0.00390625
        %v447 = vmul.f32 %v405, 0.00390625
        %v448 = vmul.f32 %v408, 0.00390625
        %v449 = vmul.f32 %v411, 0.00390625
        %v450 = vmul.f32 %v414, 0.00390625
        %v451 = vmul.f32 %v417, 0.00390625
        %v452 = vmul.f32 %v420, 0.00390625
        %v453 = vld [vmem:[#allocation5] sm:$0xff]
        %v454 = vld [vmem:[#allocation5 + $0x8] sm:$0xff]
        %v455 = vld [vmem:[#allocation5 + $0x10] sm:$0xff]
        %v456 = vld [vmem:[#allocation5 + $0x18] sm:$0xff]
        %v457 = vld [vmem:[#allocation5 + $0x20] sm:$0xff]
        %v458 = vld [vmem:[#allocation5 + $0x28] sm:$0xff]
        %v459 = vld [vmem:[#allocation5 + $0x30] sm:$0xff]
        %v460 = vld [vmem:[#allocation5 + $0x38] sm:$0xff]
        %v461 = vld [vmem:[#allocation5 + $0x40] sm:$0xff]
        %v462 = vld [vmem:[#allocation5 + $0x48] sm:$0xff]
        %v463 = vld [vmem:[#allocation5 + $0x50] sm:$0xff]
        %v464 = vld [vmem:[#allocation5 + $0x58] sm:$0xff]
        %v465 = vld [vmem:[#allocation5 + $0x60] sm:$0xff]
        %v466 = vld [vmem:[#allocation5 + $0x68] sm:$0xff]
        %v467 = vld [vmem:[#allocation5 + $0x70] sm:$0xff]
        %v468 = vld [vmem:[#allocation5 + $0x78] sm:$0xff]
        %v469 = vld [vmem:[#allocation5 + $0x80] sm:$0xff]
        %v470 = vld [vmem:[#allocation5 + $0x88] sm:$0xff]
        %v471 = vld [vmem:[#allocation5 + $0x90] sm:$0xff]
        %v472 = vld [vmem:[#allocation5 + $0x98] sm:$0xff]
        %v473 = vld [vmem:[#allocation5 + $0xa0] sm:$0xff]
        %v474 = vld [vmem:[#allocation5 + $0xa8] sm:$0xff]
        %v475 = vld [vmem:[#allocation5 + $0xb0] sm:$0xff]
        %v476 = vld [vmem:[#allocation5 + $0xb8] sm:$0xff]
        %v477 = vld [vmem:[#allocation5 + $0xc0] sm:$0xff]
        %v478 = vld [vmem:[#allocation5 + $0xc8] sm:$0xff]
        %v479 = vld [vmem:[#allocation5 + $0xd0] sm:$0xff]
        %v480 = vld [vmem:[#allocation5 + $0xd8] sm:$0xff]
        %v481 = vld [vmem:[#allocation5 + $0xe0] sm:$0xff]
        %v482 = vld [vmem:[#allocation5 + $0xe8] sm:$0xff]
        %v483 = vld [vmem:[#allocation5 + $0xf0] sm:$0xff]
        %v484 = vld [vmem:[#allocation5 + $0xf8] sm:$0xff]
        %v485 = vld [vmem:[#allocation5 + $0x100] sm:$0xff]
        %v486 = vld [vmem:[#allocation5 + $0x108] sm:$0xff]
        %v487 = vld [vmem:[#allocation5 + $0x110] sm:$0xff]
        %v488 = vld [vmem:[#allocation5 + $0x118] sm:$0xff]
        %v489 = vld [vmem:[#allocation5 + $0x120] sm:$0xff]
        %v490 = vld [vmem:[#allocation5 + $0x128] sm:$0xff]
        %v491 = vld [vmem:[#allocation5 + $0x130] sm:$0xff]
        %v492 = vld [vmem:[#allocation5 + $0x138] sm:$0xff]
        %v493 = vld [vmem:[#allocation5 + $0x140] sm:$0xff]
        %v494 = vld [vmem:[#allocation5 + $0x148] sm:$0xff]
        %v495 = vld [vmem:[#allocation5 + $0x150] sm:$0xff]
        %v496 = vld [vmem:[#allocation5 + $0x158] sm:$0xff]
        %v497 = vld [vmem:[#allocation5 + $0x160] sm:$0xff]
        %v498 = vld [vmem:[#allocation5 + $0x168] sm:$0xff]
        %v499 = vld [vmem:[#allocation5 + $0x170] sm:$0xff]
        %v500 = vld [vmem:[#allocation5 + $0x178] sm:$0xff]
        %v501 = vld [vmem:[#allocation5 + $0x180] sm:$0xff]
        %v502 = vld [vmem:[#allocation5 + $0x188] sm:$0xff]
        %v503 = vld [vmem:[#allocation5 + $0x190] sm:$0xff]
        %v504 = vld [vmem:[#allocation5 + $0x198] sm:$0xff]
        %v505 = vld [vmem:[#allocation5 + $0x1a0] sm:$0xff]
        %v506 = vld [vmem:[#allocation5 + $0x1a8] sm:$0xff]
        %v507 = vld [vmem:[#allocation5 + $0x1b0] sm:$0xff]
        %v508 = vld [vmem:[#allocation5 + $0x1b8] sm:$0xff]
        %v509 = vld [vmem:[#allocation5 + $0x1c0] sm:$0xff]
        %v510 = vld [vmem:[#allocation5 + $0x1c8] sm:$0xff]
        %v511 = vld [vmem:[#allocation5 + $0x1d0] sm:$0xff]
        %v512 = vld [vmem:[#allocation5 + $0x1d8] sm:$0xff]
        %v513 = vld [vmem:[#allocation5 + $0x1e0] sm:$0xff]
        %v514 = vld [vmem:[#allocation5 + $0x1e8] sm:$0xff]
        %v515 = vld [vmem:[#allocation5 + $0x1f0] sm:$0xff]
        %v516 = vld [vmem:[#allocation5 + $0x1f8] sm:$0xff]
        %v517 = vld [vmem:[%s2] sm:$0x3]
        %v550 = vlaneseq
        %v551 = vand.u32 %v550, 127
        %v552 = vperm.slane %v421, %v551
        %v553 = vadd.s32 %v551, 4294967288
        %v554 = vperm.slane %v422, %v553
        %vm555 = vcmask 130112
        %v556 = vsel %vm555, %v554, %v552
        %v557 = vadd.s32 %v551, 4294967280
        %v558 = vperm.slane %v423, %v557
        %vm559 = vcmask 195712
        %v560 = vsel %vm559, %v558, %v556
        %v561 = vadd.s32 %v551, 4294967272
        %v562 = vperm.slane %v424, %v561
        %vm563 = vcmask 261312
        %v564 = vsel %vm563, %v562, %v560
        %v565 = vadd.s32 %v551, 4294967264
        %v566 = vperm.slane %v425, %v565
        %vm567 = vcmask 326912
        %v568 = vsel %vm567, %v566, %v564
        %v569 = vadd.s32 %v551, 4294967256
        %v570 = vperm.slane %v426, %v569
        %vm571 = vcmask 392512
        %v572 = vsel %vm571, %v570, %v568
        %v573 = vadd.s32 %v551, 4294967248
        %v574 = vperm.slane %v427, %v573
        %vm575 = vcmask 458112
        %v576 = vsel %vm575, %v574, %v572
        %v577 = vadd.s32 %v551, 4294967240
        %v578 = vperm.slane %v428, %v577
        %vm579 = vcmask 523712
        %v580 = vsel %vm579, %v578, %v576
        %v581 = vadd.s32 %v551, 4294967232
        %v582 = vperm.slane %v429, %v581
        %vm583 = vcmask 589312
        %v584 = vsel %vm583, %v582, %v580
        %v585 = vadd.s32 %v551, 4294967224
        %v586 = vperm.slane %v430, %v585
        %vm587 = vcmask 654912
        %v588 = vsel %vm587, %v586, %v584
        %v589 = vadd.s32 %v551, 4294967216
        %v590 = vperm.slane %v431, %v589
        %vm591 = vcmask 720512
        %v592 = vsel %vm591, %v590, %v588
        %v593 = vadd.s32 %v551, 4294967208
        %v594 = vperm.slane %v432, %v593
        %vm595 = vcmask 786112
        %v596 = vsel %vm595, %v594, %v592
        %v597 = vadd.s32 %v551, 4294967200
        %v598 = vperm.slane %v433, %v597
        %vm599 = vcmask 851712
        %v600 = vsel %vm599, %v598, %v596
        %v601 = vadd.s32 %v551, 4294967192
        %v602 = vperm.slane %v434, %v601
        %vm603 = vcmask 917312
        %v604 = vsel %vm603, %v602, %v600
        %v605 = vadd.s32 %v551, 4294967184
        %v606 = vperm.slane %v435, %v605
        %vm607 = vcmask 982912
        %v608 = vsel %vm607, %v606, %v604
        %v609 = vadd.s32 %v551, 4294967176
        %v610 = vperm.slane %v436, %v609
        %vm611 = vcmask 1048512
        %v612 = vsel %vm611, %v610, %v608
        %v613 = vperm.slane %v437, %v551
        %v614 = vperm.slane %v438, %v553
        %v615 = vsel %vm555, %v614, %v613
        %v616 = vperm.slane %v439, %v557
        %v617 = vsel %vm559, %v616, %v615
        %v618 = vperm.slane %v440, %v561
        %v619 = vsel %vm563, %v618, %v617
        %v620 = vperm.slane %v441, %v565
        %v621 = vsel %vm567, %v620, %v619
        %v622 = vperm.slane %v442, %v569
        %v623 = vsel %vm571, %v622, %v621
        %v624 = vperm.slane %v443, %v573
        %v625 = vsel %vm575, %v624, %v623
        %v626 = vperm.slane %v444, %v577
        %v627 = vsel %vm579, %v626, %v625
        %v628 = vperm.slane %v445, %v581
        %v629 = vsel %vm583, %v628, %v627
        %v630 = vperm.slane %v446, %v585
        %v631 = vsel %vm587, %v630, %v629
        %v632 = vperm.slane %v447, %v589
        %v633 = vsel %vm591, %v632, %v631
        %v634 = vperm.slane %v448, %v593
        %v635 = vsel %vm595, %v634, %v633
        %v636 = vperm.slane %v449, %v597
        %v637 = vsel %vm599, %v636, %v635
        %v638 = vperm.slane %v450, %v601
        %v639 = vsel %vm603, %v638, %v637
        %v640 = vperm.slane %v451, %v605
        %v641 = vsel %vm607, %v640, %v639
        %v642 = vperm.slane %v452, %v609
        %v643 = vsel %vm611, %v642, %v641
        %v647 = vperm.slane %v517, 0
        %v648 = vperm.slane %v517, 1
        %651 = vmatpush.msra.mxu0 %v483
        %652 = vmatpush.msra.mxu0 %v481
        %653 = vmatpush.msra.mxu0 %v479
        %654 = vmatpush.msra.mxu0 %v477
        %655 = vmatpush.msra.mxu0 %v475
        %656 = vmatpush.msra.mxu0 %v473
        %657 = vmatpush.msra.mxu0 %v471
        %658 = vmatpush.msra.mxu0 %v469
        %659 = vmatpush.msra.mxu0 %v467
        %660 = vmatpush.msra.mxu0 %v465
        %661 = vmatpush.msra.mxu0 %v463
        %662 = vmatpush.msra.mxu0 %v461
        %663 = vmatpush.msra.mxu0 %v459
        %664 = vmatpush.msra.mxu0 %v457
        %665 = vmatpush.msra.mxu0 %v455
        %666 = vmatpush.msra.mxu0 %v453
        %667 = vmatmul.f32.gmra.mxu0 %v612
        %v668 = vpop.f32.mrf.mxu0
        %v669 = vadd.f32 %v647, %v668
        %670 = vdwg.mxu0
        %671 = vmatpush.msra.mxu0 %v515
        %672 = vmatpush.msra.mxu0 %v513
        %673 = vmatpush.msra.mxu0 %v511
        %674 = vmatpush.msra.mxu0 %v509
        %675 = vmatpush.msra.mxu0 %v507
        %676 = vmatpush.msra.mxu0 %v505
        %677 = vmatpush.msra.mxu0 %v503
        %678 = vmatpush.msra.mxu0 %v501
        %679 = vmatpush.msra.mxu0 %v499
        %680 = vmatpush.msra.mxu0 %v497
        %681 = vmatpush.msra.mxu0 %v495
        %682 = vmatpush.msra.mxu0 %v493
        %683 = vmatpush.msra.mxu0 %v491
        %684 = vmatpush.msra.mxu0 %v489
        %685 = vmatpush.msra.mxu0 %v487
        %686 = vmatpush.msra.mxu0 %v485
        %687 = vmatmul.f32.gmra.mxu0 %v643
        %v688 = vpop.f32.mrf.mxu0
        %v689 = vadd.f32 %v669, %v688
        %690 = vdwg.mxu0
        %691 = vmatpush.msra.mxu0 %v484
        %692 = vmatpush.msra.mxu0 %v482
        %693 = vmatpush.msra.mxu0 %v480
        %694 = vmatpush.msra.mxu0 %v478
        %695 = vmatpush.msra.mxu0 %v476
        %696 = vmatpush.msra.mxu0 %v474
        %697 = vmatpush.msra.mxu0 %v472
        %698 = vmatpush.msra.mxu0 %v470
        %699 = vmatpush.msra.mxu0 %v468
        %700 = vmatpush.msra.mxu0 %v466
        %701 = vmatpush.msra.mxu0 %v464
        %702 = vmatpush.msra.mxu0 %v462
        %703 = vmatpush.msra.mxu0 %v460
        %704 = vmatpush.msra.mxu0 %v458
        %705 = vmatpush.msra.mxu0 %v456
        %706 = vmatpush.msra.mxu0 %v454
        %707 = vmatmul.f32.gmra.mxu0 %v612
        %v708 = vpop.f32.mrf.mxu0
        %v709 = vadd.f32 %v648, %v708
        %710 = vdwg.mxu0
        %711 = vmatpush.msra.mxu0 %v516
        %712 = vmatpush.msra.mxu0 %v514
        %713 = vmatpush.msra.mxu0 %v512
        %714 = vmatpush.msra.mxu0 %v510
        %715 = vmatpush.msra.mxu0 %v508
        %716 = vmatpush.msra.mxu0 %v506
        %717 = vmatpush.msra.mxu0 %v504
        %718 = vmatpush.msra.mxu0 %v502
        %719 = vmatpush.msra.mxu0 %v500
        %720 = vmatpush.msra.mxu0 %v498
        %721 = vmatpush.msra.mxu0 %v496
        %722 = vmatpush.msra.mxu0 %v494
        %723 = vmatpush.msra.mxu0 %v492
        %724 = vmatpush.msra.mxu0 %v490
        %725 = vmatpush.msra.mxu0 %v488
        %726 = vmatpush.msra.mxu0 %v486
        %727 = vmatmul.f32.gmra.mxu0 %v643
        %v728 = vpop.f32.mrf.mxu0
        %v729 = vadd.f32 %v709, %v728
        %730 = vdwg.mxu0
        %vm731 = vcmp.gt.f32.partialorder %v689, 0.0
        %vm732 = vcmp.gt.f32.partialorder %v729, 0.0
        %v733 = vmul.f32 %v689, 0.01
        %v734 = vmul.f32 %v729, 0.01
        %v735 = vsel %vm731, %v689, %v733
        %v736 = vsel %vm732, %v729, %v734
        %v737 = vld [vmem:[%s3] sm:$0x3]
        %v739 = vperm.slane %v737, 0
        %v740 = vperm.slane %v737, 1
        %v743 = vmul.f32 %v735, %v739
        %v744 = vmul.f32 %v736, %v740
        %vm745 = vcmask 1040384
        %v746 = vsel %vm745, %v743, 0.0
        %v747 = vsel %vm745, %v744, 0.0
        %v748 = vadd.f32 %v746, %v747
        %749 = vadd.xlane.f32.xlu0 %v748
        %v750 = vpop.xlane.xlu0 %749
        %s751 = sld [smem:[#allocation2]]
        %v752 = vstv %s751
        %v753 = vadd.f32 %v750, %v752
        %vm754 = vcmask 0
        %755 = vst.msk [vmem:[%s260] sm:$0x1] %vm754, %v753
        %p756 = scmp.lt.s32.totalorder %s21, 1
        %s757 = scalar_select %p756, %s21, 1
        %s758 = scalar_lea.vmem %s5, %s757
        // Predicated region
        $region49: #{tpu_custom_call.1} parent=39 // pred_check
          %p759 = pneg %p149
        $region50: #{tpu_custom_call.1} parent=39 // pred_check_branch
          %761 = sbr.rel (%p759) target = $region52
        $region51: #{tpu_custom_call.1} parent=39 // pred_region
          _
        $region52: #{tpu_custom_call.1} parent=39 // pred_fallthru
          _
      $region40: #{tpu_custom_call.1} parent=5 // pred_fallthru
        _
      %p762 = scmp.le.s32.totalorder 2, %s16
      // Predicated region
      $region53: #{tpu_custom_call.1} parent=5 // pred_check
        %p763 = pneg %p762
      $region54: #{tpu_custom_call.1} parent=5 // pred_check_branch
        %765 = sbr.rel (%p763) target = $region56
      $region55: #{tpu_custom_call.1} parent=5 // pred_region
        %s766 = ssub.s32 %s16, 2
        // Predicated region
        $region57: #{tpu_custom_call.1} parent=55 // pred_check
          %p767 = pneg %p155
        $region58: #{tpu_custom_call.1} parent=55 // pred_check_branch
          %769 = sbr.rel (%p767) target = $region60
        $region59: #{tpu_custom_call.1} parent=55 // pred_region
          %p770 = scmp.lt.s32.totalorder %s22, 1
          %s771 = scalar_select %p770, %s22, 1
          %s772 = scalar_lea.vmem %s5, %s771
        $region60: #{tpu_custom_call.1} parent=55 // pred_fallthru
          _
      $region56: #{tpu_custom_call.1} parent=5 // pred_fallthru
        _
    $region6: #{tpu_custom_call.1} parent=1 // loop_footer
      %s20 = sadd.s32 1, %s16
    $region7: #{tpu_custom_call.1} parent=1 // loop_footer_branch
      %15 = sbr.rel target = $region3
    $region8: #{tpu_custom_call.1} parent=1 // loop_exit
      _
    %773 = vsyncpa [#allocation4], 1
    %s774 = scalar_lea.sflag [#allocation4], 1
    %775 = vsyncpa %s774, 1
    %776 = vsyncpa [#allocation6], 1

// kernel: tpu_custom_call.1
$region0: #{tpu_custom_call.1}
  #allocation0 [shape = 'u32[]', space=smem, size = 0x4, offset = 0x4, fixed_abs, tag = 'smem constant byte address 0x4 - core index']
  #allocation1 [shape = 'u32[72,128]{1,0:T(1,128)}', space=vmem, size = 0x9000, scoped, tag = 'internal scratch']
  #allocation2 [shape = 'f32[1]{0:T(128)S(6)}', space=smem, size = 0x200, scoped, tag = 'scoped memory for tpu_custom_call.1']
  %s0 = inlined_call_operand.hbm [shape: f32[2,256,256], index: 0, kind: input, shape index: {}]
  %s1 = inlined_call_operand.hbm [shape: f32[256,256], index: 1, kind: input, shape index: {}]
  %s2 = inlined_call_operand.vmem [shape: f32[1,256], index: 2, kind: input, shape index: {}]
  %s3 = inlined_call_operand.vmem [shape: f32[1,256], index: 3, kind: input, shape index: {}]
  %s4 = inlined_call_operand.<no memory space> [shape: f32[1], index: 4, kind: input, shape index: {}]
  %s5 = inlined_call_operand.vmem [shape: f32[2,1,1], index: 5, kind: output, shape index: {}]
  %s6 = sld [smem:[#allocation0]]
  $region61: #{tpu_custom_call.1} parent=0
    _
  %s8 = ssub.s32 1, %s6
  %s9 = scalar_select 0, %s8, %s6
  %10 = sst [smem:[#allocation2]] %s4
  $region1: #{tpu_custom_call.1} parent=0
    #allocation3 [shape = 'u8[524288]{0}', space=vmem, size = 0x80000, scoped, tag = 'input window, operand 0']
    #allocation4 [shape = 's32[2]{0}', space=sflag, size = 0x8, scoped, tag = 'scoped memory for tpu_custom_call.1']
    #allocation5 [shape = 'u8[262144]{0}', space=vmem, size = 0x40000, scoped, tag = 'input window, operand 1, single buffered']
    #allocation6 [shape = 's32[1]{0}', space=sflag, size = 0x4, scoped, tag = 'scoped memory for tpu_custom_call.1']
    %11 = vsyncpa [#allocation4], 0
    %s12 = scalar_lea.sflag [#allocation4], 1
    %13 = vsyncpa %s12, 0
    %14 = vsyncpa [#allocation6], 0
    loop: start=0, step=1, limit=4
    $region2: #{tpu_custom_call.1} parent=1 // loop_pre_header
      _
    $region3: #{tpu_custom_call.1} parent=1 // loop_header
      %s16 = sphi 0, %s20
      %p17 = scmp.ge.s32.totalorder %s16, 4
      %s26 = sphi 0, %s28
      %s29 = sphi 0, %s26
      %s30 = sphi 0, %s29
      %s46 = sphi 0, %s30
      %s50 = sphi 0, %s50
      %s52 = sphi 0, %s50
      %s53 = sphi 0, %s52
      %s67 = sphi 0, %s53
      %s71 = sphi 0, %s71
      %s73 = sphi 0, %s71
      %s74 = sphi 0, %s73
      %s88 = sphi 0, %s74
      %s92 = sphi 0, %s92
      %s94 = sphi 0, %s92
      %s95 = sphi 0, %s94
      %s109 = sphi 0, %s95
      %s113 = sphi 0, %s113
      %s115 = sphi 0, %s113
      %s116 = sphi 0, %s115
      %s130 = sphi 0, %s116
      %s136 = sphi 0, %s138
      %s139 = sphi 0, %s136
      %s140 = sphi 0, %s139
      %s156 = sphi 0, %s140
    $region4: #{tpu_custom_call.1} parent=1 // loop_header_branch
      %19 = sbr.rel (%p17) target = $region8
    $region5: #{tpu_custom_call.1} parent=1 // loop_body
      %s21 = ssub.s32 %s16, 1
      %s22 = ssub.s32 %s16, 2
      %s23 = sadd.s32 %s16, 1
      %s24 = ssub.s32 %s16, %s23
      %p25 = scmp.eq.s32.totalorder %s24, 0
      %s27 = sadd.s32 %s26, 1
      %s28 = scalar_select %p25, %s26, %s27
      %p31 = pneg %p25
      %p32 = scmp.eq.s32.totalorder %s16, 1
      %p33 = por %p31, %p32
      %p34 = scmp.ne.s32.totalorder %s26, %s29
      %p35 = scmp.eq.s32.totalorder %s16, 0
      %p36 = por %p34, %p35
      %p37 = scmp.ne.s32.totalorder %s26, %s29
      %p38 = scmp.eq.s32.totalorder %s21, 1
      %p39 = por %p37, %p38
      %p40 = scmp.ne.s32.totalorder %s29, %s30
      %p41 = scmp.eq.s32.totalorder %s21, 0
      %p42 = por %p40, %p41
      %p43 = scmp.ne.s32.totalorder %s29, %s30
      %p44 = scmp.eq.s32.totalorder %s22, 1
      %p45 = por %p43, %p44
      %p47 = scmp.ne.s32.totalorder %s30, %s46
      %p48 = scmp.eq.s32.totalorder %s22, 0
      %p49 = por %p47, %p48
      %s51 = sadd.s32 %s50, 1
      %p54 = scmp.eq.s32.totalorder %s16, 1
      %p55 = scmp.ne.s32.totalorder %s50, %s52
      %p56 = scmp.eq.s32.totalorder %s16, 0
      %p57 = por %p55, %p56
      %p58 = scmp.ne.s32.totalorder %s50, %s52
      %p59 = scmp.eq.s32.totalorder %s21, 1
      %p60 = por %p58, %p59
      %p61 = scmp.ne.s32.totalorder %s52, %s53
      %p62 = scmp.eq.s32.totalorder %s21, 0
      %p63 = por %p61, %p62
      %p64 = scmp.ne.s32.totalorder %s52, %s53
      %p65 = scmp.eq.s32.totalorder %s22, 1
      %p66 = por %p64, %p65
      %p68 = scmp.ne.s32.totalorder %s53, %s67
      %p69 = scmp.eq.s32.totalorder %s22, 0
      %p70 = por %p68, %p69
      %s72 = sadd.s32 %s71, 1
      %p75 = scmp.eq.s32.totalorder %s16, 1
      %p76 = scmp.ne.s32.totalorder %s71, %s73
      %p77 = scmp.eq.s32.totalorder %s16, 0
      %p78 = por %p76, %p77
      %p79 = scmp.ne.s32.totalorder %s71, %s73
      %p80 = scmp.eq.s32.totalorder %s21, 1
      %p81 = por %p79, %p80
      %p82 = scmp.ne.s32.totalorder %s73, %s74
      %p83 = scmp.eq.s32.totalorder %s21, 0
      %p84 = por %p82, %p83
      %p85 = scmp.ne.s32.totalorder %s73, %s74
      %p86 = scmp.eq.s32.totalorder %s22, 1
      %p87 = por %p85, %p86
      %p89 = scmp.ne.s32.totalorder %s74, %s88
      %p90 = scmp.eq.s32.totalorder %s22, 0
      %p91 = por %p89, %p90
      %s93 = sadd.s32 %s92, 1
      %p96 = scmp.eq.s32.totalorder %s16, 1
      %p97 = scmp.ne.s32.totalorder %s92, %s94
      %p98 = scmp.eq.s32.totalorder %s16, 0
      %p99 = por %p97, %p98
      %p100 = scmp.ne.s32.totalorder %s92, %s94
      %p101 = scmp.eq.s32.totalorder %s21, 1
      %p102 = por %p100, %p101
      %p103 = scmp.ne.s32.totalorder %s94, %s95
      %p104 = scmp.eq.s32.totalorder %s21, 0
      %p105 = por %p103, %p104
      %p106 = scmp.ne.s32.totalorder %s94, %s95
      %p107 = scmp.eq.s32.totalorder %s22, 1
      %p108 = por %p106, %p107
      %p110 = scmp.ne.s32.totalorder %s95, %s109
      %p111 = scmp.eq.s32.totalorder %s22, 0
      %p112 = por %p110, %p111
      %s114 = sadd.s32 %s113, 1
      %p117 = scmp.eq.s32.totalorder %s16, 1
      %p118 = scmp.ne.s32.totalorder %s113, %s115
      %p119 = scmp.eq.s32.totalorder %s16, 0
      %p120 = por %p118, %p119
      %p121 = scmp.ne.s32.totalorder %s113, %s115
      %p122 = scmp.eq.s32.totalorder %s21, 1
      %p123 = por %p121, %p122
      %p124 = scmp.ne.s32.totalorder %s115, %s116
      %p125 = scmp.eq.s32.totalorder %s21, 0
      %p126 = por %p124, %p125
      %p127 = scmp.ne.s32.totalorder %s115, %s116
      %p128 = scmp.eq.s32.totalorder %s22, 1
      %p129 = por %p127, %p128
      %p131 = scmp.ne.s32.totalorder %s116, %s130
      %p132 = scmp.eq.s32.totalorder %s22, 0
      %p133 = por %p131, %p132
      %s134 = ssub.s32 %s16, %s23
      %p135 = scmp.eq.s32.totalorder %s134, 0
      %s137 = sadd.s32 %s136, 1
      %s138 = scalar_select %p135, %s136, %s137
      %p141 = pneg %p135
      %p142 = scmp.eq.s32.totalorder %s16, 1
      %p143 = por %p141, %p142
      %p144 = scmp.ne.s32.totalorder %s136, %s139
      %p145 = scmp.eq.s32.totalorder %s16, 0
      %p146 = por %p144, %p145
      %p147 = scmp.ne.s32.totalorder %s136, %s139
      %p148 = scmp.eq.s32.totalorder %s21, 1
      %p149 = por %p147, %p148
      %p150 = scmp.ne.s32.totalorder %s139, %s140
      %p151 = scmp.eq.s32.totalorder %s21, 0
      %p152 = por %p150, %p151
      %p153 = scmp.ne.s32.totalorder %s139, %s140
      %p154 = scmp.eq.s32.totalorder %s22, 1
      %p155 = por %p153, %p154
      %p157 = scmp.ne.s32.totalorder %s140, %s156
      %p158 = scmp.eq.s32.totalorder %s22, 0
      %p159 = por %p157, %p158
      %p160 = scmp.le.s32.totalorder 1, %s16
      %p161 = scmp.lt.s32.totalorder %s16, 3
      %p162 = pnand %p160, %p161
      %p163 = pneg %p162
      // Predicated region
      $region9: #{tpu_custom_call.1} parent=5 // pred_check
        _
      $region10: #{tpu_custom_call.1} parent=5 // pred_check_branch
        %165 = sbr.rel (%p162) target = $region12
      $region11: #{tpu_custom_call.1} parent=5 // pred_region
        %s166 = ssub.s32 %s16, 1
        // Predicated region
        $region13: #{tpu_custom_call.1} parent=11 // pred_check
          %p167 = pneg %p63
        $region14: #{tpu_custom_call.1} parent=11 // pred_check_branch
          %169 = sbr.rel (%p167) target = $region16
        $region15: #{tpu_custom_call.1} parent=11 // pred_region
          %171 = vsyncadd [#allocation6], 0
          %s172 = sshll.u32 %s1, 4
          %s173 = int_to_ptr.hbm [resolvable:$true] %s172
          %s174 = sshll.u32 [#allocation5], 4
          %s175 = int_to_ptr.vmem [resolvable:$true] %s174
          %180 = dma.hbm_to_vmem [thread:$0]  %s173, 8192, %s175, [#allocation6], 256, 256, 16
        $region16: #{tpu_custom_call.1} parent=11 // pred_fallthru
          _
        // Predicated region
        $region17: #{tpu_custom_call.1} parent=11 // pred_check
          %p181 = pneg %p84
        $region18: #{tpu_custom_call.1} parent=11 // pred_check_branch
          %183 = sbr.rel (%p181) target = $region20
        $region19: #{tpu_custom_call.1} parent=11 // pred_region
          _
        $region20: #{tpu_custom_call.1} parent=11 // pred_fallthru
          _
        // Predicated region
        $region21: #{tpu_custom_call.1} parent=11 // pred_check
          %p184 = pneg %p105
        $region22: #{tpu_custom_call.1} parent=11 // pred_check_branch
          %186 = sbr.rel (%p184) target = $region24
        $region23: #{tpu_custom_call.1} parent=11 // pred_region
          _
        $region24: #{tpu_custom_call.1} parent=11 // pred_fallthru
          _
        // Predicated region
        $region25: #{tpu_custom_call.1} parent=11 // pred_check
          %p187 = pneg %p126
        $region26: #{tpu_custom_call.1} parent=11 // pred_check_branch
          %189 = sbr.rel (%p187) target = $region28
        $region27: #{tpu_custom_call.1} parent=11 // pred_region
          _
        $region28: #{tpu_custom_call.1} parent=11 // pred_fallthru
          _
      $region12: #{tpu_custom_call.1} parent=5 // pred_fallthru
        _
      %p190 = scmp.lt.s32.totalorder %s16, 2
      // Predicated region
      $region29: #{tpu_custom_call.1} parent=5 // pred_check
        %p191 = pneg %p190
      $region30: #{tpu_custom_call.1} parent=5 // pred_check_branch
        %193 = sbr.rel (%p191) target = $region32
      $region31: #{tpu_custom_call.1} parent=5 // pred_region
        // Predicated region
        $region33: #{tpu_custom_call.1} parent=31 // pred_check
          %p194 = pneg %p36
        $region34: #{tpu_custom_call.1} parent=31 // pred_check_branch
          %196 = sbr.rel (%p194) target = $region36
        $region35: #{tpu_custom_call.1} parent=31 // pred_region
          %s197 = sand.u32 %s26, 1
          %s198 = scalar_lea.sflag [#allocation4], %s197
          %s199 = sand.u32 %s26, 1
          %s200 = smul.addr %s199, 512
          %s201 = scalar_lea.vmem [#allocation3], %s200
          %203 = vsyncadd %s198, 0
          %s204 = smul.addr %s16, 64
          %s205 = smul.addr %s204, 8
          %s206 = scalar_lea.hbm %s0, %s205
          %s207 = sshll.u32 %s206, 4
          %s208 = int_to_ptr.hbm [resolvable:$true] %s207
          %s209 = sshll.u32 %s201, 4
          %s210 = int_to_ptr.vmem [resolvable:$true] %s209
          %215 = dma.hbm_to_vmem [thread:$0]  %s208, 8192, %s210, %s198, 256, 256, 16
        $region36: #{tpu_custom_call.1} parent=31 // pred_fallthru
          _
      $region32: #{tpu_custom_call.1} parent=5 // pred_fallthru
        _
      %p216 = scmp.le.s32.totalorder 1, %s16
      %p217 = scmp.lt.s32.totalorder %s16, 3
      %p218 = pnand %p216, %p217
      %p219 = pneg %p218
      // Predicated region
      $region37: #{tpu_custom_call.1} parent=5 // pred_check
        _
      $region38: #{tpu_custom_call.1} parent=5 // pred_check_branch
        %221 = sbr.rel (%p218) target = $region40
      $region39: #{tpu_custom_call.1} parent=5 // pred_region
        %s222 = ssub.s32 %s16, 1
        %s223 = sand.u32 %s29, 1
        %s224 = scalar_lea.sflag [#allocation4], %s223
        %s225 = sand.u32 %s29, 1
        %s226 = smul.addr %s225, 512
        %s227 = scalar_lea.vmem [#allocation3], %s226
        // Predicated region
        $region41: #{tpu_custom_call.1} parent=39 // pred_check
          %p228 = pneg %p42
        $region42: #{tpu_custom_call.1} parent=39 // pred_check_branch
          %230 = sbr.rel (%p228) target = $region44
        $region43: #{tpu_custom_call.1} parent=39 // pred_region
          %232 = dma.done %s224, 8192
        $region44: #{tpu_custom_call.1} parent=39 // pred_fallthru
          _
        // Predicated region
        $region45: #{tpu_custom_call.1} parent=39 // pred_check
          %p233 = pneg %p63
        $region46: #{tpu_custom_call.1} parent=39 // pred_check_branch
          %235 = sbr.rel (%p233) target = $region48
        $region47: #{tpu_custom_call.1} parent=39 // pred_region
          %237 = dma.done [#allocation6], 8192
        $region48: #{tpu_custom_call.1} parent=39 // pred_fallthru
          _
        %s238 = sand.u32 %s29, 1
        %s239 = scalar_lea.sflag [#allocation4], %s238
        %s240 = sand.u32 %s29, 1
        %s241 = smul.addr %s240, 512
        %s242 = scalar_lea.vmem [#allocation3], %s241
        %p243 = pneg %p42
        %p244 = pneg %p39
        %p245 = pneg %p63
        %p246 = pneg %p60
        %p247 = pneg %p84
        %p248 = pneg %p81
        %p249 = pneg %p105
        %p250 = pneg %p102
        %p251 = pneg %p126
        %p252 = pneg %p123
        %p253 = pneg %p152
        %p254 = pneg %p149
        %p255 = scmp.lt.s32.totalorder %s21, 1
        %s256 = scalar_select %p255, %s21, 1
        %s257 = scalar_lea.vmem %s5, %s256
        %p258 = scmp.lt.s32.totalorder %s21, 1
        %s259 = scalar_select %p258, %s21, 1
        %s260 = scalar_lea.vmem %s5, %s259
        %v261 = vld [vmem:[%s227] sm:$0xff]
        %v262 = vld [vmem:[%s227 + $0x8] sm:$0xff]
        %v263 = vld [vmem:[%s227 + $0x10] sm:$0xff]
        %v264 = vld [vmem:[%s227 + $0x18] sm:$0xff]
        %v265 = vld [vmem:[%s227 + $0x20] sm:$0xff]
        %v266 = vld [vmem:[%s227 + $0x28] sm:$0xff]
        %v267 = vld [vmem:[%s227 + $0x30] sm:$0xff]
        %v268 = vld [vmem:[%s227 + $0x38] sm:$0xff]
        %v269 = vld [vmem:[%s227 + $0x40] sm:$0xff]
        %v270 = vld [vmem:[%s227 + $0x48] sm:$0xff]
        %v271 = vld [vmem:[%s227 + $0x50] sm:$0xff]
        %v272 = vld [vmem:[%s227 + $0x58] sm:$0xff]
        %v273 = vld [vmem:[%s227 + $0x60] sm:$0xff]
        %v274 = vld [vmem:[%s227 + $0x68] sm:$0xff]
        %v275 = vld [vmem:[%s227 + $0x70] sm:$0xff]
        %v276 = vld [vmem:[%s227 + $0x78] sm:$0xff]
        %v277 = vld [vmem:[%s227 + $0x80] sm:$0xff]
        %v278 = vld [vmem:[%s227 + $0x88] sm:$0xff]
        %v279 = vld [vmem:[%s227 + $0x90] sm:$0xff]
        %v280 = vld [vmem:[%s227 + $0x98] sm:$0xff]
        %v281 = vld [vmem:[%s227 + $0xa0] sm:$0xff]
        %v282 = vld [vmem:[%s227 + $0xa8] sm:$0xff]
        %v283 = vld [vmem:[%s227 + $0xb0] sm:$0xff]
        %v284 = vld [vmem:[%s227 + $0xb8] sm:$0xff]
        %v285 = vld [vmem:[%s227 + $0xc0] sm:$0xff]
        %v286 = vld [vmem:[%s227 + $0xc8] sm:$0xff]
        %v287 = vld [vmem:[%s227 + $0xd0] sm:$0xff]
        %v288 = vld [vmem:[%s227 + $0xd8] sm:$0xff]
        %v289 = vld [vmem:[%s227 + $0xe0] sm:$0xff]
        %v290 = vld [vmem:[%s227 + $0xe8] sm:$0xff]
        %v291 = vld [vmem:[%s227 + $0xf0] sm:$0xff]
        %v292 = vld [vmem:[%s227 + $0xf8] sm:$0xff]
        %v293 = vld [vmem:[%s227 + $0x100] sm:$0xff]
        %v294 = vld [vmem:[%s227 + $0x108] sm:$0xff]
        %v295 = vld [vmem:[%s227 + $0x110] sm:$0xff]
        %v296 = vld [vmem:[%s227 + $0x118] sm:$0xff]
        %v297 = vld [vmem:[%s227 + $0x120] sm:$0xff]
        %v298 = vld [vmem:[%s227 + $0x128] sm:$0xff]
        %v299 = vld [vmem:[%s227 + $0x130] sm:$0xff]
        %v300 = vld [vmem:[%s227 + $0x138] sm:$0xff]
        %v301 = vld [vmem:[%s227 + $0x140] sm:$0xff]
        %v302 = vld [vmem:[%s227 + $0x148] sm:$0xff]
        %v303 = vld [vmem:[%s227 + $0x150] sm:$0xff]
        %v304 = vld [vmem:[%s227 + $0x158] sm:$0xff]
        %v305 = vld [vmem:[%s227 + $0x160] sm:$0xff]
        %v306 = vld [vmem:[%s227 + $0x168] sm:$0xff]
        %v307 = vld [vmem:[%s227 + $0x170] sm:$0xff]
        %v308 = vld [vmem:[%s227 + $0x178] sm:$0xff]
        %v309 = vld [vmem:[%s227 + $0x180] sm:$0xff]
        %v310 = vld [vmem:[%s227 + $0x188] sm:$0xff]
        %v311 = vld [vmem:[%s227 + $0x190] sm:$0xff]
        %v312 = vld [vmem:[%s227 + $0x198] sm:$0xff]
        %v313 = vld [vmem:[%s227 + $0x1a0] sm:$0xff]
        %v314 = vld [vmem:[%s227 + $0x1a8] sm:$0xff]
        %v315 = vld [vmem:[%s227 + $0x1b0] sm:$0xff]
        %v316 = vld [vmem:[%s227 + $0x1b8] sm:$0xff]
        %v317 = vld [vmem:[%s227 + $0x1c0] sm:$0xff]
        %v318 = vld [vmem:[%s227 + $0x1c8] sm:$0xff]
        %v319 = vld [vmem:[%s227 + $0x1d0] sm:$0xff]
        %v320 = vld [vmem:[%s227 + $0x1d8] sm:$0xff]
        %v321 = vld [vmem:[%s227 + $0x1e0] sm:$0xff]
        %v322 = vld [vmem:[%s227 + $0x1e8] sm:$0xff]
        %v323 = vld [vmem:[%s227 + $0x1f0] sm:$0xff]
        %v324 = vld [vmem:[%s227 + $0x1f8] sm:$0xff]
        %v325 = vadd.f32 %v261, %v262
        %326 = vadd.xlane.f32.xlu0 %v325
        %v327 = vpop.xlane.xlu0 %326
        %v328 = vadd.f32 %v263, %v264
        %329 = vadd.xlane.f32.xlu0 %v328
        %v330 = vpop.xlane.xlu0 %329
        %v331 = vadd.f32 %v265, %v266
        %332 = vadd.xlane.f32.xlu0 %v331
        %v333 = vpop.xlane.xlu0 %332
        %v334 = vadd.f32 %v267, %v268
        %335 = vadd.xlane.f32.xlu0 %v334
        %v336 = vpop.xlane.xlu0 %335
        %v337 = vadd.f32 %v269, %v270
        %338 = vadd.xlane.f32.xlu0 %v337
        %v339 = vpop.xlane.xlu0 %338
        %v340 = vadd.f32 %v271, %v272
        %341 = vadd.xlane.f32.xlu0 %v340
        %v342 = vpop.xlane.xlu0 %341
        %v343 = vadd.f32 %v273, %v274
        %344 = vadd.xlane.f32.xlu0 %v343
        %v345 = vpop.xlane.xlu0 %344
        %v346 = vadd.f32 %v275, %v276
        %347 = vadd.xlane.f32.xlu0 %v346
        %v348 = vpop.xlane.xlu0 %347
        %v349 = vadd.f32 %v277, %v278
        %350 = vadd.xlane.f32.xlu0 %v349
        %v351 = vpop.xlane.xlu0 %350
        %v352 = vadd.f32 %v279, %v280
        %353 = vadd.xlane.f32.xlu0 %v352
        %v354 = vpop.xlane.xlu0 %353
        %v355 = vadd.f32 %v281, %v282
        %356 = vadd.xlane.f32.xlu0 %v355
        %v357 = vpop.xlane.xlu0 %356
        %v358 = vadd.f32 %v283, %v284
        %359 = vadd.xlane.f32.xlu0 %v358
        %v360 = vpop.xlane.xlu0 %359
        %v361 = vadd.f32 %v285, %v286
        %362 = vadd.xlane.f32.xlu0 %v361
        %v363 = vpop.xlane.xlu0 %362
        %v364 = vadd.f32 %v287, %v288
        %365 = vadd.xlane.f32.xlu0 %v364
        %v366 = vpop.xlane.xlu0 %365
        %v367 = vadd.f32 %v289, %v290
        %368 = vadd.xlane.f32.xlu0 %v367
        %v369 = vpop.xlane.xlu0 %368
        %v370 = vadd.f32 %v291, %v292
        %371 = vadd.xlane.f32.xlu0 %v370
        %v372 = vpop.xlane.xlu0 %371
        %v373 = vadd.f32 %v293, %v294
        %374 = vadd.xlane.f32.xlu0 %v373
        %v375 = vpop.xlane.xlu0 %374
        %v376 = vadd.f32 %v295, %v296
        %377 = vadd.xlane.f32.xlu0 %v376
        %v378 = vpop.xlane.xlu0 %377
        %v379 = vadd.f32 %v297, %v298
        %380 = vadd.xlane.f32.xlu0 %v379
        %v381 = vpop.xlane.xlu0 %380
        %v382 = vadd.f32 %v299, %v300
        %383 = vadd.xlane.f32.xlu0 %v382
        %v384 = vpop.xlane.xlu0 %383
        %v385 = vadd.f32 %v301, %v302
        %386 = vadd.xlane.f32.xlu0 %v385
        %v387 = vpop.xlane.xlu0 %386
        %v388 = vadd.f32 %v303, %v304
        %389 = vadd.xlane.f32.xlu0 %v388
        %v390 = vpop.xlane.xlu0 %389
        %v391 = vadd.f32 %v305, %v306
        %392 = vadd.xlane.f32.xlu0 %v391
        %v393 = vpop.xlane.xlu0 %392
        %v394 = vadd.f32 %v307, %v308
        %395 = vadd.xlane.f32.xlu0 %v394
        %v396 = vpop.xlane.xlu0 %395
        %v397 = vadd.f32 %v309, %v310
        %398 = vadd.xlane.f32.xlu0 %v397
        %v399 = vpop.xlane.xlu0 %398
        %v400 = vadd.f32 %v311, %v312
        %401 = vadd.xlane.f32.xlu0 %v400
        %v402 = vpop.xlane.xlu0 %401
        %v403 = vadd.f32 %v313, %v314
        %404 = vadd.xlane.f32.xlu0 %v403
        %v405 = vpop.xlane.xlu0 %404
        %v406 = vadd.f32 %v315, %v316
        %407 = vadd.xlane.f32.xlu0 %v406
        %v408 = vpop.xlane.xlu0 %407
        %v409 = vadd.f32 %v317, %v318
        %410 = vadd.xlane.f32.xlu0 %v409
        %v411 = vpop.xlane.xlu0 %410
        %v412 = vadd.f32 %v319, %v320
        %413 = vadd.xlane.f32.xlu0 %v412
        %v414 = vpop.xlane.xlu0 %413
        %v415 = vadd.f32 %v321, %v322
        %416 = vadd.xlane.f32.xlu0 %v415
        %v417 = vpop.xlane.xlu0 %416
        %v418 = vadd.f32 %v323, %v324
        %419 = vadd.xlane.f32.xlu0 %v418
        %v420 = vpop.xlane.xlu0 %419
        %v421 = vmul.f32 %v327, 0.00390625
        %v422 = vmul.f32 %v330, 0.00390625
        %v423 = vmul.f32 %v333, 0.00390625
        %v424 = vmul.f32 %v336, 0.00390625
        %v425 = vmul.f32 %v339, 0.00390625
        %v426 = vmul.f32 %v342, 0.00390625
        %v427 = vmul.f32 %v345, 0.00390625
        %v428 = vmul.f32 %v348, 0.00390625
        %v429 = vmul.f32 %v351, 0.00390625
        %v430 = vmul.f32 %v354, 0.00390625
        %v431 = vmul.f32 %v357, 0.00390625
        %v432 = vmul.f32 %v360, 0.00390625
        %v433 = vmul.f32 %v363, 0.00390625
        %v434 = vmul.f32 %v366, 0.00390625
        %v435 = vmul.f32 %v369, 0.00390625
        %v436 = vmul.f32 %v372, 0.00390625
        %v437 = vmul.f32 %v375, 0.00390625
        %v438 = vmul.f32 %v378, 0.00390625
        %v439 = vmul.f32 %v381, 0.00390625
        %v440 = vmul.f32 %v384, 0.00390625
        %v441 = vmul.f32 %v387, 0.00390625
        %v442 = vmul.f32 %v390, 0.00390625
        %v443 = vmul.f32 %v393, 0.00390625
        %v444 = vmul.f32 %v396, 0.00390625
        %v445 = vmul.f32 %v399, 0.00390625
        %v446 = vmul.f32 %v402, 0.00390625
        %v447 = vmul.f32 %v405, 0.00390625
        %v448 = vmul.f32 %v408, 0.00390625
        %v449 = vmul.f32 %v411, 0.00390625
        %v450 = vmul.f32 %v414, 0.00390625
        %v451 = vmul.f32 %v417, 0.00390625
        %v452 = vmul.f32 %v420, 0.00390625
        %v453 = vld [vmem:[#allocation5] sm:$0xff]
        %v454 = vld [vmem:[#allocation5 + $0x8] sm:$0xff]
        %v455 = vld [vmem:[#allocation5 + $0x10] sm:$0xff]
        %v456 = vld [vmem:[#allocation5 + $0x18] sm:$0xff]
        %v457 = vld [vmem:[#allocation5 + $0x20] sm:$0xff]
        %v458 = vld [vmem:[#allocation5 + $0x28] sm:$0xff]
        %v459 = vld [vmem:[#allocation5 + $0x30] sm:$0xff]
        %v460 = vld [vmem:[#allocation5 + $0x38] sm:$0xff]
        %v461 = vld [vmem:[#allocation5 + $0x40] sm:$0xff]
        %v462 = vld [vmem:[#allocation5 + $0x48] sm:$0xff]
        %v463 = vld [vmem:[#allocation5 + $0x50] sm:$0xff]
        %v464 = vld [vmem:[#allocation5 + $0x58] sm:$0xff]
        %v465 = vld [vmem:[#allocation5 + $0x60] sm:$0xff]
        %v466 = vld [vmem:[#allocation5 + $0x68] sm:$0xff]
        %v467 = vld [vmem:[#allocation5 + $0x70] sm:$0xff]
        %v468 = vld [vmem:[#allocation5 + $0x78] sm:$0xff]
        %v469 = vld [vmem:[#allocation5 + $0x80] sm:$0xff]
        %v470 = vld [vmem:[#allocation5 + $0x88] sm:$0xff]
        %v471 = vld [vmem:[#allocation5 + $0x90] sm:$0xff]
        %v472 = vld [vmem:[#allocation5 + $0x98] sm:$0xff]
        %v473 = vld [vmem:[#allocation5 + $0xa0] sm:$0xff]
        %v474 = vld [vmem:[#allocation5 + $0xa8] sm:$0xff]
        %v475 = vld [vmem:[#allocation5 + $0xb0] sm:$0xff]
        %v476 = vld [vmem:[#allocation5 + $0xb8] sm:$0xff]
        %v477 = vld [vmem:[#allocation5 + $0xc0] sm:$0xff]
        %v478 = vld [vmem:[#allocation5 + $0xc8] sm:$0xff]
        %v479 = vld [vmem:[#allocation5 + $0xd0] sm:$0xff]
        %v480 = vld [vmem:[#allocation5 + $0xd8] sm:$0xff]
        %v481 = vld [vmem:[#allocation5 + $0xe0] sm:$0xff]
        %v482 = vld [vmem:[#allocation5 + $0xe8] sm:$0xff]
        %v483 = vld [vmem:[#allocation5 + $0xf0] sm:$0xff]
        %v484 = vld [vmem:[#allocation5 + $0xf8] sm:$0xff]
        %v485 = vld [vmem:[#allocation5 + $0x100] sm:$0xff]
        %v486 = vld [vmem:[#allocation5 + $0x108] sm:$0xff]
        %v487 = vld [vmem:[#allocation5 + $0x110] sm:$0xff]
        %v488 = vld [vmem:[#allocation5 + $0x118] sm:$0xff]
        %v489 = vld [vmem:[#allocation5 + $0x120] sm:$0xff]
        %v490 = vld [vmem:[#allocation5 + $0x128] sm:$0xff]
        %v491 = vld [vmem:[#allocation5 + $0x130] sm:$0xff]
        %v492 = vld [vmem:[#allocation5 + $0x138] sm:$0xff]
        %v493 = vld [vmem:[#allocation5 + $0x140] sm:$0xff]
        %v494 = vld [vmem:[#allocation5 + $0x148] sm:$0xff]
        %v495 = vld [vmem:[#allocation5 + $0x150] sm:$0xff]
        %v496 = vld [vmem:[#allocation5 + $0x158] sm:$0xff]
        %v497 = vld [vmem:[#allocation5 + $0x160] sm:$0xff]
        %v498 = vld [vmem:[#allocation5 + $0x168] sm:$0xff]
        %v499 = vld [vmem:[#allocation5 + $0x170] sm:$0xff]
        %v500 = vld [vmem:[#allocation5 + $0x178] sm:$0xff]
        %v501 = vld [vmem:[#allocation5 + $0x180] sm:$0xff]
        %v502 = vld [vmem:[#allocation5 + $0x188] sm:$0xff]
        %v503 = vld [vmem:[#allocation5 + $0x190] sm:$0xff]
        %v504 = vld [vmem:[#allocation5 + $0x198] sm:$0xff]
        %v505 = vld [vmem:[#allocation5 + $0x1a0] sm:$0xff]
        %v506 = vld [vmem:[#allocation5 + $0x1a8] sm:$0xff]
        %v507 = vld [vmem:[#allocation5 + $0x1b0] sm:$0xff]
        %v508 = vld [vmem:[#allocation5 + $0x1b8] sm:$0xff]
        %v509 = vld [vmem:[#allocation5 + $0x1c0] sm:$0xff]
        %v510 = vld [vmem:[#allocation5 + $0x1c8] sm:$0xff]
        %v511 = vld [vmem:[#allocation5 + $0x1d0] sm:$0xff]
        %v512 = vld [vmem:[#allocation5 + $0x1d8] sm:$0xff]
        %v513 = vld [vmem:[#allocation5 + $0x1e0] sm:$0xff]
        %v514 = vld [vmem:[#allocation5 + $0x1e8] sm:$0xff]
        %v515 = vld [vmem:[#allocation5 + $0x1f0] sm:$0xff]
        %v516 = vld [vmem:[#allocation5 + $0x1f8] sm:$0xff]
        %v517 = vld [vmem:[%s2] sm:$0x3]
        %v550 = vlaneseq
        %v551 = vand.u32 %v550, 127
        %v552 = vperm.slane %v421, %v551
        %v553 = vadd.s32 %v551, 4294967288
        %v554 = vperm.slane %v422, %v553
        %vm555 = vcmask 130112
        %v556 = vsel %vm555, %v554, %v552
        %v557 = vadd.s32 %v551, 4294967280
        %v558 = vperm.slane %v423, %v557
        %vm559 = vcmask 195712
        %v560 = vsel %vm559, %v558, %v556
        %v561 = vadd.s32 %v551, 4294967272
        %v562 = vperm.slane %v424, %v561
        %vm563 = vcmask 261312
        %v564 = vsel %vm563, %v562, %v560
        %v565 = vadd.s32 %v551, 4294967264
        %v566 = vperm.slane %v425, %v565
        %vm567 = vcmask 326912
        %v568 = vsel %vm567, %v566, %v564
        %v569 = vadd.s32 %v551, 4294967256
        %v570 = vperm.slane %v426, %v569
        %vm571 = vcmask 392512
        %v572 = vsel %vm571, %v570, %v568
        %v573 = vadd.s32 %v551, 4294967248
        %v574 = vperm.slane %v427, %v573
        %vm575 = vcmask 458112
        %v576 = vsel %vm575, %v574, %v572
        %v577 = vadd.s32 %v551, 4294967240
        %v578 = vperm.slane %v428, %v577
        %vm579 = vcmask 523712
        %v580 = vsel %vm579, %v578, %v576
        %v581 = vadd.s32 %v551, 4294967232
        %v582 = vperm.slane %v429, %v581
        %vm583 = vcmask 589312
        %v584 = vsel %vm583, %v582, %v580
        %v585 = vadd.s32 %v551, 4294967224
        %v586 = vperm.slane %v430, %v585
        %vm587 = vcmask 654912
        %v588 = vsel %vm587, %v586, %v584
        %v589 = vadd.s32 %v551, 4294967216
        %v590 = vperm.slane %v431, %v589
        %vm591 = vcmask 720512
        %v592 = vsel %vm591, %v590, %v588
        %v593 = vadd.s32 %v551, 4294967208
        %v594 = vperm.slane %v432, %v593
        %vm595 = vcmask 786112
        %v596 = vsel %vm595, %v594, %v592
        %v597 = vadd.s32 %v551, 4294967200
        %v598 = vperm.slane %v433, %v597
        %vm599 = vcmask 851712
        %v600 = vsel %vm599, %v598, %v596
        %v601 = vadd.s32 %v551, 4294967192
        %v602 = vperm.slane %v434, %v601
        %vm603 = vcmask 917312
        %v604 = vsel %vm603, %v602, %v600
        %v605 = vadd.s32 %v551, 4294967184
        %v606 = vperm.slane %v435, %v605
        %vm607 = vcmask 982912
        %v608 = vsel %vm607, %v606, %v604
        %v609 = vadd.s32 %v551, 4294967176
        %v610 = vperm.slane %v436, %v609
        %vm611 = vcmask 1048512
        %v612 = vsel %vm611, %v610, %v608
        %v613 = vperm.slane %v437, %v551
        %v614 = vperm.slane %v438, %v553
        %v615 = vsel %vm555, %v614, %v613
        %v616 = vperm.slane %v439, %v557
        %v617 = vsel %vm559, %v616, %v615
        %v618 = vperm.slane %v440, %v561
        %v619 = vsel %vm563, %v618, %v617
        %v620 = vperm.slane %v441, %v565
        %v621 = vsel %vm567, %v620, %v619
        %v622 = vperm.slane %v442, %v569
        %v623 = vsel %vm571, %v622, %v621
        %v624 = vperm.slane %v443, %v573
        %v625 = vsel %vm575, %v624, %v623
        %v626 = vperm.slane %v444, %v577
        %v627 = vsel %vm579, %v626, %v625
        %v628 = vperm.slane %v445, %v581
        %v629 = vsel %vm583, %v628, %v627
        %v630 = vperm.slane %v446, %v585
        %v631 = vsel %vm587, %v630, %v629
        %v632 = vperm.slane %v447, %v589
        %v633 = vsel %vm591, %v632, %v631
        %v634 = vperm.slane %v448, %v593
        %v635 = vsel %vm595, %v634, %v633
        %v636 = vperm.slane %v449, %v597
        %v637 = vsel %vm599, %v636, %v635
        %v638 = vperm.slane %v450, %v601
        %v639 = vsel %vm603, %v638, %v637
        %v640 = vperm.slane %v451, %v605
        %v641 = vsel %vm607, %v640, %v639
        %v642 = vperm.slane %v452, %v609
        %v643 = vsel %vm611, %v642, %v641
        %v647 = vperm.slane %v517, 0
        %v648 = vperm.slane %v517, 1
        %651 = vmatpush.msra.mxu0 %v483
        %652 = vmatpush.msra.mxu0 %v481
        %653 = vmatpush.msra.mxu0 %v479
        %654 = vmatpush.msra.mxu0 %v477
        %655 = vmatpush.msra.mxu0 %v475
        %656 = vmatpush.msra.mxu0 %v473
        %657 = vmatpush.msra.mxu0 %v471
        %658 = vmatpush.msra.mxu0 %v469
        %659 = vmatpush.msra.mxu0 %v467
        %660 = vmatpush.msra.mxu0 %v465
        %661 = vmatpush.msra.mxu0 %v463
        %662 = vmatpush.msra.mxu0 %v461
        %663 = vmatpush.msra.mxu0 %v459
        %664 = vmatpush.msra.mxu0 %v457
        %665 = vmatpush.msra.mxu0 %v455
        %666 = vmatpush.msra.mxu0 %v453
        %667 = vmatmul.f32.gmra.mxu0 %v612
        %v668 = vpop.f32.mrf.mxu0
        %v669 = vadd.f32 %v647, %v668
        %670 = vdwg.mxu0
        %671 = vmatpush.msra.mxu0 %v515
        %672 = vmatpush.msra.mxu0 %v513
        %673 = vmatpush.msra.mxu0 %v511
        %674 = vmatpush.msra.mxu0 %v509
        %675 = vmatpush.msra.mxu0 %v507
        %676 = vmatpush.msra.mxu0 %v505
        %677 = vmatpush.msra.mxu0 %v503
        %678 = vmatpush.msra.mxu0 %v501
        %679 = vmatpush.msra.mxu0 %v499
        %680 = vmatpush.msra.mxu0 %v497
        %681 = vmatpush.msra.mxu0 %v495
        %682 = vmatpush.msra.mxu0 %v493
        %683 = vmatpush.msra.mxu0 %v491
        %684 = vmatpush.msra.mxu0 %v489
        %685 = vmatpush.msra.mxu0 %v487
        %686 = vmatpush.msra.mxu0 %v485
        %687 = vmatmul.f32.gmra.mxu0 %v643
        %v688 = vpop.f32.mrf.mxu0
        %v689 = vadd.f32 %v669, %v688
        %690 = vdwg.mxu0
        %691 = vmatpush.msra.mxu0 %v484
        %692 = vmatpush.msra.mxu0 %v482
        %693 = vmatpush.msra.mxu0 %v480
        %694 = vmatpush.msra.mxu0 %v478
        %695 = vmatpush.msra.mxu0 %v476
        %696 = vmatpush.msra.mxu0 %v474
        %697 = vmatpush.msra.mxu0 %v472
        %698 = vmatpush.msra.mxu0 %v470
        %699 = vmatpush.msra.mxu0 %v468
        %700 = vmatpush.msra.mxu0 %v466
        %701 = vmatpush.msra.mxu0 %v464
        %702 = vmatpush.msra.mxu0 %v462
        %703 = vmatpush.msra.mxu0 %v460
        %704 = vmatpush.msra.mxu0 %v458
        %705 = vmatpush.msra.mxu0 %v456
        %706 = vmatpush.msra.mxu0 %v454
        %707 = vmatmul.f32.gmra.mxu0 %v612
        %v708 = vpop.f32.mrf.mxu0
        %v709 = vadd.f32 %v648, %v708
        %710 = vdwg.mxu0
        %711 = vmatpush.msra.mxu0 %v516
        %712 = vmatpush.msra.mxu0 %v514
        %713 = vmatpush.msra.mxu0 %v512
        %714 = vmatpush.msra.mxu0 %v510
        %715 = vmatpush.msra.mxu0 %v508
        %716 = vmatpush.msra.mxu0 %v506
        %717 = vmatpush.msra.mxu0 %v504
        %718 = vmatpush.msra.mxu0 %v502
        %719 = vmatpush.msra.mxu0 %v500
        %720 = vmatpush.msra.mxu0 %v498
        %721 = vmatpush.msra.mxu0 %v496
        %722 = vmatpush.msra.mxu0 %v494
        %723 = vmatpush.msra.mxu0 %v492
        %724 = vmatpush.msra.mxu0 %v490
        %725 = vmatpush.msra.mxu0 %v488
        %726 = vmatpush.msra.mxu0 %v486
        %727 = vmatmul.f32.gmra.mxu0 %v643
        %v728 = vpop.f32.mrf.mxu0
        %v729 = vadd.f32 %v709, %v728
        %730 = vdwg.mxu0
        %vm731 = vcmp.gt.f32.partialorder %v689, 0.0
        %vm732 = vcmp.gt.f32.partialorder %v729, 0.0
        %v733 = vmul.f32 %v689, 0.01
        %v734 = vmul.f32 %v729, 0.01
        %v735 = vsel %vm731, %v689, %v733
        %v736 = vsel %vm732, %v729, %v734
        %v737 = vld [vmem:[%s3] sm:$0x3]
        %v739 = vperm.slane %v737, 0
        %v740 = vperm.slane %v737, 1
        %v743 = vmul.f32 %v735, %v739
        %v744 = vmul.f32 %v736, %v740
        %vm745 = vcmask 1040384
        %v746 = vsel %vm745, %v743, 0.0
        %v747 = vsel %vm745, %v744, 0.0
        %v748 = vadd.f32 %v746, %v747
        %749 = vadd.xlane.f32.xlu0 %v748
        %v750 = vpop.xlane.xlu0 %749
        %s751 = sld [smem:[#allocation2]]
        %v752 = vstv %s751
        %v753 = vadd.f32 %v750, %v752
        %vm754 = vcmask 0
        %755 = vst.msk [vmem:[%s260] sm:$0x1] %vm754, %v753
        %p756 = scmp.lt.s32.totalorder %s21, 1
        %s757 = scalar_select %p756, %s21, 1
        %s758 = scalar_lea.vmem %s5, %s757
        // Predicated region
        $region49: #{tpu_custom_call.1} parent=39 // pred_check
          %p759 = pneg %p149
        $region50: #{tpu_custom_call.1} parent=39 // pred_check_branch
          %761 = sbr.rel (%p759) target = $region52
        $region51: #{tpu_custom_call.1} parent=39 // pred_region
          _
        $region52: #{tpu_custom_call.1} parent=39 // pred_fallthru
          _
      $region40: #{tpu_custom_call.1} parent=5 // pred_fallthru
        _
      %p762 = scmp.le.s32.totalorder 2, %s16
      // Predicated region
      $region53: #{tpu_custom_call.1} parent=5 // pred_check
        %p763 = pneg %p762
      $region54: #{tpu_custom_call.1} parent=5 // pred_check_branch
        %765 = sbr.rel (%p763) target = $region56
      $region55: #{tpu_custom_call.1} parent=5 // pred_region
        %s766 = ssub.s32 %s16, 2
        // Predicated region
        $region57: #{tpu_custom_call.1} parent=55 // pred_check
          %p767 = pneg %p155
        $region58: #{tpu_custom_call.1} parent=55 // pred_check_branch
          %769 = sbr.rel (%p767) target = $region60
        $region59: #{tpu_custom_call.1} parent=55 // pred_region
          %p770 = scmp.lt.s32.totalorder %s22, 1
          %s771 = scalar_select %p770, %s22, 1
          %s772 = scalar_lea.vmem %s5, %s771
        $region60: #{tpu_custom_call.1} parent=55 // pred_fallthru
          _
      $region56: #{tpu_custom_call.1} parent=5 // pred_fallthru
        _
    $region6: #{tpu_custom_call.1} parent=1 // loop_footer
      %s20 = sadd.s32 1, %s16
    $region7: #{tpu_custom_call.1} parent=1 // loop_footer_branch
      %15 = sbr.rel target = $region3
    $region8: #{tpu_custom_call.1} parent=1 // loop_exit
      _
    %773 = vsyncpa [#allocation4], 1
    %s774 = scalar_lea.sflag [#allocation4], 1
    %775 = vsyncpa %s774, 1
    %776 = vsyncpa [#allocation6], 1

</llo_original>
